<compile_context>
chip_gen: v7x
topology: tpu7x:2x2x1
jax: 0.10.0
libtpu: 0.0.40
codegen_flags: <defaults>
</compile_context>

<pallas_src>
import math

import jax
import jax.numpy as jnp
from jax.experimental import pallas as pl
from jax.experimental.pallas import tpu as pltpu


def _layer_norm(z, gamma, beta, eps=1e-5):
    mu = jnp.mean(z, axis=-1, keepdims=True)
    var = jnp.mean(jnp.square(z - mu), axis=-1, keepdims=True)
    return (z - mu) * jax.lax.rsqrt(var + eps) * gamma + beta


def _encoder_block_kernel(valid_lens_ref,                  # (B,) int32 in SMEM (prefetch)
                          x_ref,                           # (TB, S, H) f32
                          wq_ref, wk_ref, wv_ref,          # (nh, H, d) bf16 each
                          wo_ref,                           # (H, H) bf16
                          g1_ref, b1_ref,                   # (1, H) f32  LayerNorm 1
                          w1_ref, bf1_ref,                  # (H, F) bf16, (1, F) f32
                          w2_ref, bf2_ref,                  # (F, H) bf16, (1, H) f32
                          g2_ref, b2_ref,                   # (1, H) f32  LayerNorm 2
                          o_ref):                           # (TB, S, H)
    g = pl.program_id(0)
    tb, s, h = x_ref.shape
    num_heads, _, d = wq_ref.shape

    # Residual / LayerNorm path stays f32; MXU operands are bf16.
    x = x_ref[...].astype(jnp.float32).reshape(tb * s, h)
    xb = x.astype(jnp.bfloat16)

    # Per-sequence key mask (mask padded key positions for every query row).
    key_pos = jax.lax.broadcasted_iota(jnp.int32, (1, s, s), 2)
    key_mask = jnp.concatenate(
        [key_pos < valid_lens_ref[g * tb + t] for t in range(tb)], axis=0)  # (TB,S,S)

    scale = jnp.float32(1.0 / math.sqrt(d))

    # Static unroll over heads (num_heads is small here).
    # TODO(synk): switch to lax.fori_loop(..., unroll=True) if num_heads grows.
    heads = []
    for hd in range(num_heads):
        # Per-head projections via the head-reshaped (VMEM-resident) weights:
        # activations are read full-width, never lane-sliced.
        qh = jnp.dot(xb, wq_ref[hd], preferred_element_type=jnp.float32)
        kh = jnp.dot(xb, wk_ref[hd], preferred_element_type=jnp.float32)
        vh = jnp.dot(xb, wv_ref[hd], preferred_element_type=jnp.float32)
        qh = qh.reshape(tb, s, d).astype(jnp.bfloat16)
        kh = kh.reshape(tb, s, d).astype(jnp.bfloat16)
        vh = vh.reshape(tb, s, d).astype(jnp.bfloat16)

        # Contract over the last dims directly (no explicit .T / XLU transpose).
        scores = jnp.einsum("bqd,bkd->bqk", qh, kh,
                            preferred_element_type=jnp.float32) * scale
        scores = jnp.where(key_mask, scores, jnp.float32(-1e6))
        scores = scores - jnp.max(scores, axis=-1, keepdims=True)
        p = jnp.exp(scores)
        p = p * pl.reciprocal(jnp.sum(p, axis=-1, keepdims=True), approx=True)

        ctx = jnp.einsum("bqk,bkd->bqd", p.astype(jnp.bfloat16), vh,
                         preferred_element_type=jnp.float32)           # (TB,S,d)
        heads.append(ctx.reshape(tb * s, d))

    # concat(heads) @ Wo as ONE K=H matmul (instead of num_heads K=d matmuls).
    ctx_cat = jnp.concatenate(heads, axis=-1).astype(jnp.bfloat16)     # (TB*S, H)
    attn_out = jnp.dot(ctx_cat, wo_ref[...], preferred_element_type=jnp.float32)

    # TODO(synk): dropout is identity here (eval-mode forward).

    # --- AddNorm1 (f32) ---
    y = _layer_norm(attn_out + x, g1_ref[...], b1_ref[...])

    # --- position-wise FFN (bf16 MXU operands, f32 accumulation) ---
    hid = jnp.maximum(
        jnp.dot(y.astype(jnp.bfloat16), w1_ref[...],
                preferred_element_type=jnp.float32) + bf1_ref[...], 0.0)
    ffn = jnp.dot(hid.astype(jnp.bfloat16), w2_ref[...],
                  preferred_element_type=jnp.float32) + bf2_ref[...]

    # --- AddNorm2 (f32) ---
    out = _layer_norm(ffn + y, g2_ref[...], b2_ref[...])
    o_ref[...] = out.reshape(tb, s, h).astype(o_ref.dtype)


def _pick_tb(batch, seq, target_rows=128):
    """Sequences per grid step so each step has ~target_rows MXU rows."""
    tb = min(batch, max(1, -(-target_rows // seq)))   # ceil(target_rows / seq)
    while batch % tb:
        tb -= 1
    return tb


def encoder_block_forward(x, valid_lens, params, *, num_heads):
    """x: (B, S, H) f32, valid_lens: (B,) int32.  Eval-mode EncoderBlock forward."""
    B, S, H = x.shape
    assert H % num_heads == 0
    d = H // num_heads
    wq, wk, wv, wo, g1, b1, w1, bf1, w2, bf2, g2, b2 = params
    F = w1.shape[1]

    # Row batching: TB sequences per grid step (amortize per-step overhead,
    # fill the MXU M dimension). At realistic batch sizes the resulting grid
    # stays >= 2 so v7x's two TensorCores both get work.
    TB = _pick_tb(B, S)
    grid = (B // TB,)

    def head_split(w):   # (H, H) -> (num_heads, H, d), bf16 MXU operand
        return jnp.transpose(w.reshape(H, num_heads, d), (1, 0, 2)).astype(jnp.bfloat16)

    wq_h, wk_h, wv_h = head_split(wq), head_split(wk), head_split(wv)
    wo_b = wo.astype(jnp.bfloat16)
    w1_b = w1.astype(jnp.bfloat16)
    w2_b = w2.astype(jnp.bfloat16)

    def wspec(shape):
        # Constant block index -> weight stays resident in VMEM across steps.
        if len(shape) == 2:
            return pl.BlockSpec(shape, lambda g, vl: (0, 0))
        return pl.BlockSpec(shape, lambda g, vl: (0, 0, 0))

    grid_spec = pltpu.PrefetchScalarGridSpec(
        num_scalar_prefetch=1,                       # valid_lens -> SMEM
        grid=grid,
        in_specs=[
            pl.BlockSpec((TB, S, H), lambda g, vl: (g, 0, 0)),   # X slab
            wspec((num_heads, H, d)),   # Wq (head-reshaped, bf16)
            wspec((num_heads, H, d)),   # Wk
            wspec((num_heads, H, d)),   # Wv
            wspec((H, H)),              # Wo (bf16)
            wspec((1, H)),              # gamma1
            wspec((1, H)),              # beta1
            wspec((H, F)),              # FFN W1 (bf16)
            wspec((1, F)),              # FFN b1
            wspec((F, H)),              # FFN W2 (bf16)
            wspec((1, H)),              # FFN b2
            wspec((1, H)),              # gamma2
            wspec((1, H)),              # beta2
        ],
        out_specs=pl.BlockSpec((TB, S, H), lambda g, vl: (g, 0, 0)),
    )

    return pl.pallas_call(
        _encoder_block_kernel,
        out_shape=jax.ShapeDtypeStruct((B, S, H), x.dtype),
        grid_spec=grid_spec,
        compiler_params=pltpu.CompilerParams(
            dimension_semantics=("parallel",),       # independent batch slabs
            vmem_limit_bytes=48 * 1024 * 1024,       # resident weights > scoped default at scale
        ),
    )(valid_lens, x, wq_h, wk_h, wv_h, wo_b, g1, b1, w1_b, bf1, w2_b, bf2, g2, b2)


# ------------------------- pure-JAX reference -------------------------------
def encoder_block_reference(x, valid_lens, params, *, num_heads):
    wq, wk, wv, wo, g1, b1, w1, bf1, w2, bf2, g2, b2 = params
    B, S, H = x.shape
    d = H // num_heads

    def split(t):
        return t.reshape(B, S, num_heads, d).transpose(0, 2, 1, 3)

    q, k, v = split(x @ wq), split(x @ wk), split(x @ wv)
    scores = jnp.einsum("bhqd,bhkd->bhqk", q, k) / math.sqrt(d)
    mask = jnp.arange(S)[None, :] < valid_lens[:, None]            # (B, S) keys
    scores = jnp.where(mask[:, None, None, :], scores, -1e6)
    attn = jax.nn.softmax(scores, axis=-1)
    ctx = jnp.einsum("bhqk,bhkd->bhqd", attn, v)
    ctx = ctx.transpose(0, 2, 1, 3).reshape(B, S, H)
    attn_out = ctx @ wo

    def ln(z, gamma, beta, eps=1e-5):
        mu = z.mean(-1, keepdims=True)
        var = ((z - mu) ** 2).mean(-1, keepdims=True)
        return (z - mu) / jnp.sqrt(var + eps) * gamma + beta

    y = ln(attn_out + x, g1, b1)
    f = jnp.maximum(y @ w1 + bf1, 0.0) @ w2 + bf2
    return ln(f + y, g2, b2)


if __name__ == "__main__":
    # Small shapes consistent with the module: batch=2, seq=8, num_hiddens=32,
    # num_heads=4, ffn_num_hiddens=64.
    B, S, H = 2, 8, 32
    num_heads, F = 4, 64

    root = jax.random.PRNGKey(0)
    ks = jax.random.split(root, 13)
    w_scale = 0.1

    x = jax.random.normal(ks[0], (B, S, H), jnp.float32)
    valid_lens = jnp.array([S, 5], dtype=jnp.int32)

    wq = w_scale * jax.random.normal(ks[1], (H, H), jnp.float32)
    wk = w_scale * jax.random.normal(ks[2], (H, H), jnp.float32)
    wv = w_scale * jax.random.normal(ks[3], (H, H), jnp.float32)
    wo = w_scale * jax.random.normal(ks[4], (H, H), jnp.float32)
    g1 = 1.0 + 0.1 * jax.random.normal(ks[5], (1, H), jnp.float32)
    b1 = 0.1 * jax.random.normal(ks[6], (1, H), jnp.float32)
    w1 = w_scale * jax.random.normal(ks[7], (H, F), jnp.float32)
    bf1 = 0.1 * jax.random.normal(ks[8], (1, F), jnp.float32)
    w2 = w_scale * jax.random.normal(ks[9], (F, H), jnp.float32)
    bf2 = 0.1 * jax.random.normal(ks[10], (1, H), jnp.float32)
    g2 = 1.0 + 0.1 * jax.random.normal(ks[11], (1, H), jnp.float32)
    b2 = 0.1 * jax.random.normal(ks[12], (1, H), jnp.float32)

    params = (wq, wk, wv, wo, g1, b1, w1, bf1, w2, bf2, g2, b2)

    out = encoder_block_forward(x, valid_lens, params, num_heads=num_heads)
    out = jax.block_until_ready(out)

    ref = encoder_block_reference(x, valid_lens, params, num_heads=num_heads)
    assert out.shape == (B, S, H)
    max_err = float(jnp.max(jnp.abs(out - ref)))
    # Tolerance loosened vs. the pure-f32 version: the kernel uses bf16 MXU
    # operands (f32 accumulation), per the perf review.
    assert jnp.allclose(out, ref, atol=3e-2, rtol=3e-2), f"mismatch, max_err={max_err}"

    print("KERNEL_OK")
</pallas_src>

<mosaic_0001>
module attributes {stable_mosaic.version = 11 : i64} {
  func.func @_encoder_block_kernel(%arg0: i32, %arg1: memref<2xi32, #tpu.memory_space<smem>>, %arg2: memref<2x8x32xf32, #tpu.memory_space<vmem>>, %arg3: memref<4x32x8xbf16, #tpu.memory_space<vmem>>, %arg4: memref<4x32x8xbf16, #tpu.memory_space<vmem>>, %arg5: memref<4x32x8xbf16, #tpu.memory_space<vmem>>, %arg6: memref<32x32xbf16, #tpu.memory_space<vmem>>, %arg7: memref<1x32xf32, #tpu.memory_space<vmem>>, %arg8: memref<1x32xf32, #tpu.memory_space<vmem>>, %arg9: memref<32x64xbf16, #tpu.memory_space<vmem>>, %arg10: memref<1x64xf32, #tpu.memory_space<vmem>>, %arg11: memref<64x32xbf16, #tpu.memory_space<vmem>>, %arg12: memref<1x32xf32, #tpu.memory_space<vmem>>, %arg13: memref<1x32xf32, #tpu.memory_space<vmem>>, %arg14: memref<1x32xf32, #tpu.memory_space<vmem>>, %arg15: memref<2x8x32xf32, #tpu.memory_space<vmem>>) attributes {dimension_semantics = [#tpu.dimension_semantics<parallel>], iteration_bounds = array<i64: 1>, scalar_prefetch = 1 : i64, scratch_operands = 0 : i64, tpu.core_type = #tpu.core_type<tc>, window_params = [{transform_indices = @transform_0, window_bounds = array<i64: 2, 8, 32>}, {pipeline_mode = #tpu.pipeline_mode<synchronous>, transform_indices = @transform_1, window_bounds = array<i64: 4, 32, 8>}, {pipeline_mode = #tpu.pipeline_mode<synchronous>, transform_indices = @transform_2, window_bounds = array<i64: 4, 32, 8>}, {pipeline_mode = #tpu.pipeline_mode<synchronous>, transform_indices = @transform_3, window_bounds = array<i64: 4, 32, 8>}, {pipeline_mode = #tpu.pipeline_mode<synchronous>, transform_indices = @transform_4, window_bounds = array<i64: 32, 32>}, {pipeline_mode = #tpu.pipeline_mode<synchronous>, transform_indices = @transform_5, window_bounds = array<i64: 1, 32>}, {pipeline_mode = #tpu.pipeline_mode<synchronous>, transform_indices = @transform_6, window_bounds = array<i64: 1, 32>}, {pipeline_mode = #tpu.pipeline_mode<synchronous>, transform_indices = @transform_7, window_bounds = array<i64: 32, 64>}, {pipeline_mode = #tpu.pipeline_mode<synchronous>, transform_indices = @transform_8, window_bounds = array<i64: 1, 64>}, {pipeline_mode = #tpu.pipeline_mode<synchronous>, transform_indices = @transform_9, window_bounds = array<i64: 64, 32>}, {pipeline_mode = #tpu.pipeline_mode<synchronous>, transform_indices = @transform_10, window_bounds = array<i64: 1, 32>}, {pipeline_mode = #tpu.pipeline_mode<synchronous>, transform_indices = @transform_11, window_bounds = array<i64: 1, 32>}, {pipeline_mode = #tpu.pipeline_mode<synchronous>, transform_indices = @transform_12, window_bounds = array<i64: 1, 32>}, {transform_indices = @transform_13, window_bounds = array<i64: 2, 8, 32>}]} {
    %c0 = arith.constant 0 : index
    %c0_0 = arith.constant 0 : index
    %c0_1 = arith.constant 0 : index
    %0 = vector.load %arg2[%c0, %c0_0, %c0_1] : memref<2x8x32xf32, #tpu.memory_space<vmem>>, vector<2x8x32xf32>
    %1 = vector.shape_cast %0 : vector<2x8x32xf32> to vector<16x32xf32>
    %2 = arith.truncf %1 : vector<16x32xf32> to vector<16x32xbf16>
    %3 = tpu.iota {dimensions = array<i32: 2>} : vector<1x8x8xi32>
    %c2_i32 = arith.constant 2 : i32
    %4 = arith.muli %arg0, %c2_i32 : i32
    %c0_i32 = arith.constant 0 : i32
    %5 = arith.addi %4, %c0_i32 : i32
    %6 = arith.index_cast %5 : i32 to index
    %7 = memref.load %arg1[%6] : memref<2xi32, #tpu.memory_space<smem>>
    %8 = vector.broadcast %7 : i32 to vector<1x8x8xi32>
    %9 = arith.cmpi slt, %3, %8 : vector<1x8x8xi32>
    %c2_i32_2 = arith.constant 2 : i32
    %10 = arith.muli %arg0, %c2_i32_2 : i32
    %c1_i32 = arith.constant 1 : i32
    %11 = arith.addi %10, %c1_i32 : i32
    %12 = arith.index_cast %11 : i32 to index
    %13 = memref.load %arg1[%12] : memref<2xi32, #tpu.memory_space<smem>>
    %14 = vector.broadcast %13 : i32 to vector<1x8x8xi32>
    %15 = arith.cmpi slt, %3, %14 : vector<1x8x8xi32>
    %16 = tpu.concatenate %9, %15 in 0 : vector<1x8x8xi1>, vector<1x8x8xi1> -> vector<2x8x8xi1>
    %c0_3 = arith.constant 0 : index
    %c0_4 = arith.constant 0 : index
    %c0_5 = arith.constant 0 : index
    %17 = vector.load %arg3[%c0_3, %c0_4, %c0_5] : memref<4x32x8xbf16, #tpu.memory_space<vmem>>, vector<1x32x8xbf16>
    %18 = vector.shape_cast %17 : vector<1x32x8xbf16> to vector<32x8xbf16>
    %cst = arith.constant dense<0.000000e+00> : vector<16x8xf32>
    %19 = tpu.matmul %2, %18, %cst {dimension_numbers = #tpu.dot_dimension_numbers<[1], [0], [0], [1], [0, 0, 1, 1], [], []>} : vector<16x32xbf16>, vector<32x8xbf16>, vector<16x8xf32> -> vector<16x8xf32>
    %c0_6 = arith.constant 0 : index
    %c0_7 = arith.constant 0 : index
    %c0_8 = arith.constant 0 : index
    %20 = vector.load %arg4[%c0_6, %c0_7, %c0_8] : memref<4x32x8xbf16, #tpu.memory_space<vmem>>, vector<1x32x8xbf16>
    %21 = vector.shape_cast %20 : vector<1x32x8xbf16> to vector<32x8xbf16>
    %cst_9 = arith.constant dense<0.000000e+00> : vector<16x8xf32>
    %22 = tpu.matmul %2, %21, %cst_9 {dimension_numbers = #tpu.dot_dimension_numbers<[1], [0], [0], [1], [0, 0, 1, 1], [], []>} : vector<16x32xbf16>, vector<32x8xbf16>, vector<16x8xf32> -> vector<16x8xf32>
    %c0_10 = arith.constant 0 : index
    %c0_11 = arith.constant 0 : index
    %c0_12 = arith.constant 0 : index
    %23 = vector.load %arg5[%c0_10, %c0_11, %c0_12] : memref<4x32x8xbf16, #tpu.memory_space<vmem>>, vector<1x32x8xbf16>
    %24 = vector.shape_cast %23 : vector<1x32x8xbf16> to vector<32x8xbf16>
    %cst_13 = arith.constant dense<0.000000e+00> : vector<16x8xf32>
    %25 = tpu.matmul %2, %24, %cst_13 {dimension_numbers = #tpu.dot_dimension_numbers<[1], [0], [0], [1], [0, 0, 1, 1], [], []>} : vector<16x32xbf16>, vector<32x8xbf16>, vector<16x8xf32> -> vector<16x8xf32>
    %26 = vector.shape_cast %19 : vector<16x8xf32> to vector<2x8x8xf32>
    %27 = arith.truncf %26 : vector<2x8x8xf32> to vector<2x8x8xbf16>
    %28 = vector.shape_cast %22 : vector<16x8xf32> to vector<2x8x8xf32>
    %29 = arith.truncf %28 : vector<2x8x8xf32> to vector<2x8x8xbf16>
    %30 = vector.shape_cast %25 : vector<16x8xf32> to vector<2x8x8xf32>
    %31 = arith.truncf %30 : vector<2x8x8xf32> to vector<2x8x8xbf16>
    "tpu.trace_start"() <{level = 10 : i32, message = "bqd,bkd->bqk"}> : () -> ()
    %cst_14 = arith.constant dense<0.000000e+00> : vector<2x8x8xf32>
    %32 = tpu.matmul %27, %29, %cst_14 {dimension_numbers = #tpu.dot_dimension_numbers<[2], [2], [1], [1], [0, 0, 0, 1, 1, 1], [0], [0]>} : vector<2x8x8xbf16>, vector<2x8x8xbf16>, vector<2x8x8xf32> -> vector<2x8x8xf32>
    "tpu.trace_stop"() : () -> ()
    %cst_15 = arith.constant 0.353553385 : f32
    %33 = vector.broadcast %cst_15 : f32 to vector<2x8x8xf32>
    %34 = arith.mulf %32, %33 : vector<2x8x8xf32>
    %cst_16 = arith.constant -1.000000e+06 : f32
    %35 = vector.broadcast %cst_16 : f32 to vector<2x8x8xf32>
    %36 = arith.select %16, %34, %35 : vector<2x8x8xi1>, vector<2x8x8xf32>
    %cst_17 = arith.constant dense<0xFF800000> : vector<2x8xf32>
    %37 = vector.multi_reduction <maximumf>, %36, %cst_17 [2] : vector<2x8x8xf32> to vector<2x8xf32>
    %38 = vector.shape_cast %37 : vector<2x8xf32> to vector<2x8x1xf32>
    %39 = vector.broadcast %38 : vector<2x8x1xf32> to vector<2x8x8xf32>
    %40 = arith.subf %36, %39 : vector<2x8x8xf32>
    %41 = math.exp %40 : vector<2x8x8xf32>
    %cst_18 = arith.constant dense<0.000000e+00> : vector<2x8xf32>
    %42 = vector.multi_reduction <add>, %41, %cst_18 [2] : vector<2x8x8xf32> to vector<2x8xf32>
    %43 = vector.shape_cast %42 : vector<2x8xf32> to vector<2x8x1xf32>
    %44 = tpu.reciprocal %43 {approx = true} : vector<2x8x1xf32> -> vector<2x8x1xf32>
    %45 = vector.broadcast %44 : vector<2x8x1xf32> to vector<2x8x8xf32>
    %46 = arith.mulf %41, %45 : vector<2x8x8xf32>
    %47 = arith.truncf %46 : vector<2x8x8xf32> to vector<2x8x8xbf16>
    "tpu.trace_start"() <{level = 10 : i32, message = "bqk,bkd->bqd"}> : () -> ()
    %cst_19 = arith.constant dense<0.000000e+00> : vector<2x8x8xf32>
    %48 = tpu.matmul %47, %31, %cst_19 {dimension_numbers = #tpu.dot_dimension_numbers<[2], [1], [1], [2], [0, 0, 0, 1, 1, 2], [0], [0]>} : vector<2x8x8xbf16>, vector<2x8x8xbf16>, vector<2x8x8xf32> -> vector<2x8x8xf32>
    "tpu.trace_stop"() : () -> ()
    %49 = vector.shape_cast %48 : vector<2x8x8xf32> to vector<16x8xf32>
    %c1 = arith.constant 1 : index
    %c0_20 = arith.constant 0 : index
    %c0_21 = arith.constant 0 : index
    %50 = vector.load %arg3[%c1, %c0_20, %c0_21] : memref<4x32x8xbf16, #tpu.memory_space<vmem>>, vector<1x32x8xbf16>
    %51 = vector.shape_cast %50 : vector<1x32x8xbf16> to vector<32x8xbf16>
    %cst_22 = arith.constant dense<0.000000e+00> : vector<16x8xf32>
    %52 = tpu.matmul %2, %51, %cst_22 {dimension_numbers = #tpu.dot_dimension_numbers<[1], [0], [0], [1], [0, 0, 1, 1], [], []>} : vector<16x32xbf16>, vector<32x8xbf16>, vector<16x8xf32> -> vector<16x8xf32>
    %c1_23 = arith.constant 1 : index
    %c0_24 = arith.constant 0 : index
    %c0_25 = arith.constant 0 : index
    %53 = vector.load %arg4[%c1_23, %c0_24, %c0_25] : memref<4x32x8xbf16, #tpu.memory_space<vmem>>, vector<1x32x8xbf16>
    %54 = vector.shape_cast %53 : vector<1x32x8xbf16> to vector<32x8xbf16>
    %cst_26 = arith.constant dense<0.000000e+00> : vector<16x8xf32>
    %55 = tpu.matmul %2, %54, %cst_26 {dimension_numbers = #tpu.dot_dimension_numbers<[1], [0], [0], [1], [0, 0, 1, 1], [], []>} : vector<16x32xbf16>, vector<32x8xbf16>, vector<16x8xf32> -> vector<16x8xf32>
    %c1_27 = arith.constant 1 : index
    %c0_28 = arith.constant 0 : index
    %c0_29 = arith.constant 0 : index
    %56 = vector.load %arg5[%c1_27, %c0_28, %c0_29] : memref<4x32x8xbf16, #tpu.memory_space<vmem>>, vector<1x32x8xbf16>
    %57 = vector.shape_cast %56 : vector<1x32x8xbf16> to vector<32x8xbf16>
    %cst_30 = arith.constant dense<0.000000e+00> : vector<16x8xf32>
    %58 = tpu.matmul %2, %57, %cst_30 {dimension_numbers = #tpu.dot_dimension_numbers<[1], [0], [0], [1], [0, 0, 1, 1], [], []>} : vector<16x32xbf16>, vector<32x8xbf16>, vector<16x8xf32> -> vector<16x8xf32>
    %59 = vector.shape_cast %52 : vector<16x8xf32> to vector<2x8x8xf32>
    %60 = arith.truncf %59 : vector<2x8x8xf32> to vector<2x8x8xbf16>
    %61 = vector.shape_cast %55 : vector<16x8xf32> to vector<2x8x8xf32>
    %62 = arith.truncf %61 : vector<2x8x8xf32> to vector<2x8x8xbf16>
    %63 = vector.shape_cast %58 : vector<16x8xf32> to vector<2x8x8xf32>
    %64 = arith.truncf %63 : vector<2x8x8xf32> to vector<2x8x8xbf16>
    "tpu.trace_start"() <{level = 10 : i32, message = "bqd,bkd->bqk"}> : () -> ()
    %cst_31 = arith.constant dense<0.000000e+00> : vector<2x8x8xf32>
    %65 = tpu.matmul %60, %62, %cst_31 {dimension_numbers = #tpu.dot_dimension_numbers<[2], [2], [1], [1], [0, 0, 0, 1, 1, 1], [0], [0]>} : vector<2x8x8xbf16>, vector<2x8x8xbf16>, vector<2x8x8xf32> -> vector<2x8x8xf32>
    "tpu.trace_stop"() : () -> ()
    %cst_32 = arith.constant 0.353553385 : f32
    %66 = vector.broadcast %cst_32 : f32 to vector<2x8x8xf32>
    %67 = arith.mulf %65, %66 : vector<2x8x8xf32>
    %cst_33 = arith.constant -1.000000e+06 : f32
    %68 = vector.broadcast %cst_33 : f32 to vector<2x8x8xf32>
    %69 = arith.select %16, %67, %68 : vector<2x8x8xi1>, vector<2x8x8xf32>
    %cst_34 = arith.constant dense<0xFF800000> : vector<2x8xf32>
    %70 = vector.multi_reduction <maximumf>, %69, %cst_34 [2] : vector<2x8x8xf32> to vector<2x8xf32>
    %71 = vector.shape_cast %70 : vector<2x8xf32> to vector<2x8x1xf32>
    %72 = vector.broadcast %71 : vector<2x8x1xf32> to vector<2x8x8xf32>
    %73 = arith.subf %69, %72 : vector<2x8x8xf32>
    %74 = math.exp %73 : vector<2x8x8xf32>
    %cst_35 = arith.constant dense<0.000000e+00> : vector<2x8xf32>
    %75 = vector.multi_reduction <add>, %74, %cst_35 [2] : vector<2x8x8xf32> to vector<2x8xf32>
    %76 = vector.shape_cast %75 : vector<2x8xf32> to vector<2x8x1xf32>
    %77 = tpu.reciprocal %76 {approx = true} : vector<2x8x1xf32> -> vector<2x8x1xf32>
    %78 = vector.broadcast %77 : vector<2x8x1xf32> to vector<2x8x8xf32>
    %79 = arith.mulf %74, %78 : vector<2x8x8xf32>
    %80 = arith.truncf %79 : vector<2x8x8xf32> to vector<2x8x8xbf16>
    "tpu.trace_start"() <{level = 10 : i32, message = "bqk,bkd->bqd"}> : () -> ()
    %cst_36 = arith.constant dense<0.000000e+00> : vector<2x8x8xf32>
    %81 = tpu.matmul %80, %64, %cst_36 {dimension_numbers = #tpu.dot_dimension_numbers<[2], [1], [1], [2], [0, 0, 0, 1, 1, 2], [0], [0]>} : vector<2x8x8xbf16>, vector<2x8x8xbf16>, vector<2x8x8xf32> -> vector<2x8x8xf32>
    "tpu.trace_stop"() : () -> ()
    %82 = vector.shape_cast %81 : vector<2x8x8xf32> to vector<16x8xf32>
    %c2 = arith.constant 2 : index
    %c0_37 = arith.constant 0 : index
    %c0_38 = arith.constant 0 : index
    %83 = vector.load %arg3[%c2, %c0_37, %c0_38] : memref<4x32x8xbf16, #tpu.memory_space<vmem>>, vector<1x32x8xbf16>
    %84 = vector.shape_cast %83 : vector<1x32x8xbf16> to vector<32x8xbf16>
    %cst_39 = arith.constant dense<0.000000e+00> : vector<16x8xf32>
    %85 = tpu.matmul %2, %84, %cst_39 {dimension_numbers = #tpu.dot_dimension_numbers<[1], [0], [0], [1], [0, 0, 1, 1], [], []>} : vector<16x32xbf16>, vector<32x8xbf16>, vector<16x8xf32> -> vector<16x8xf32>
    %c2_40 = arith.constant 2 : index
    %c0_41 = arith.constant 0 : index
    %c0_42 = arith.constant 0 : index
    %86 = vector.load %arg4[%c2_40, %c0_41, %c0_42] : memref<4x32x8xbf16, #tpu.memory_space<vmem>>, vector<1x32x8xbf16>
    %87 = vector.shape_cast %86 : vector<1x32x8xbf16> to vector<32x8xbf16>
    %cst_43 = arith.constant dense<0.000000e+00> : vector<16x8xf32>
    %88 = tpu.matmul %2, %87, %cst_43 {dimension_numbers = #tpu.dot_dimension_numbers<[1], [0], [0], [1], [0, 0, 1, 1], [], []>} : vector<16x32xbf16>, vector<32x8xbf16>, vector<16x8xf32> -> vector<16x8xf32>
    %c2_44 = arith.constant 2 : index
    %c0_45 = arith.constant 0 : index
    %c0_46 = arith.constant 0 : index
    %89 = vector.load %arg5[%c2_44, %c0_45, %c0_46] : memref<4x32x8xbf16, #tpu.memory_space<vmem>>, vector<1x32x8xbf16>
    %90 = vector.shape_cast %89 : vector<1x32x8xbf16> to vector<32x8xbf16>
    %cst_47 = arith.constant dense<0.000000e+00> : vector<16x8xf32>
    %91 = tpu.matmul %2, %90, %cst_47 {dimension_numbers = #tpu.dot_dimension_numbers<[1], [0], [0], [1], [0, 0, 1, 1], [], []>} : vector<16x32xbf16>, vector<32x8xbf16>, vector<16x8xf32> -> vector<16x8xf32>
    %92 = vector.shape_cast %85 : vector<16x8xf32> to vector<2x8x8xf32>
    %93 = arith.truncf %92 : vector<2x8x8xf32> to vector<2x8x8xbf16>
    %94 = vector.shape_cast %88 : vector<16x8xf32> to vector<2x8x8xf32>
    %95 = arith.truncf %94 : vector<2x8x8xf32> to vector<2x8x8xbf16>
    %96 = vector.shape_cast %91 : vector<16x8xf32> to vector<2x8x8xf32>
    %97 = arith.truncf %96 : vector<2x8x8xf32> to vector<2x8x8xbf16>
    "tpu.trace_start"() <{level = 10 : i32, message = "bqd,bkd->bqk"}> : () -> ()
    %cst_48 = arith.constant dense<0.000000e+00> : vector<2x8x8xf32>
    %98 = tpu.matmul %93, %95, %cst_48 {dimension_numbers = #tpu.dot_dimension_numbers<[2], [2], [1], [1], [0, 0, 0, 1, 1, 1], [0], [0]>} : vector<2x8x8xbf16>, vector<2x8x8xbf16>, vector<2x8x8xf32> -> vector<2x8x8xf32>
    "tpu.trace_stop"() : () -> ()
    %cst_49 = arith.constant 0.353553385 : f32
    %99 = vector.broadcast %cst_49 : f32 to vector<2x8x8xf32>
    %100 = arith.mulf %98, %99 : vector<2x8x8xf32>
    %cst_50 = arith.constant -1.000000e+06 : f32
    %101 = vector.broadcast %cst_50 : f32 to vector<2x8x8xf32>
    %102 = arith.select %16, %100, %101 : vector<2x8x8xi1>, vector<2x8x8xf32>
    %cst_51 = arith.constant dense<0xFF800000> : vector<2x8xf32>
    %103 = vector.multi_reduction <maximumf>, %102, %cst_51 [2] : vector<2x8x8xf32> to vector<2x8xf32>
    %104 = vector.shape_cast %103 : vector<2x8xf32> to vector<2x8x1xf32>
    %105 = vector.broadcast %104 : vector<2x8x1xf32> to vector<2x8x8xf32>
    %106 = arith.subf %102, %105 : vector<2x8x8xf32>
    %107 = math.exp %106 : vector<2x8x8xf32>
    %cst_52 = arith.constant dense<0.000000e+00> : vector<2x8xf32>
    %108 = vector.multi_reduction <add>, %107, %cst_52 [2] : vector<2x8x8xf32> to vector<2x8xf32>
    %109 = vector.shape_cast %108 : vector<2x8xf32> to vector<2x8x1xf32>
    %110 = tpu.reciprocal %109 {approx = true} : vector<2x8x1xf32> -> vector<2x8x1xf32>
    %111 = vector.broadcast %110 : vector<2x8x1xf32> to vector<2x8x8xf32>
    %112 = arith.mulf %107, %111 : vector<2x8x8xf32>
    %113 = arith.truncf %112 : vector<2x8x8xf32> to vector<2x8x8xbf16>
    "tpu.trace_start"() <{level = 10 : i32, message = "bqk,bkd->bqd"}> : () -> ()
    %cst_53 = arith.constant dense<0.000000e+00> : vector<2x8x8xf32>
    %114 = tpu.matmul %113, %97, %cst_53 {dimension_numbers = #tpu.dot_dimension_numbers<[2], [1], [1], [2], [0, 0, 0, 1, 1, 2], [0], [0]>} : vector<2x8x8xbf16>, vector<2x8x8xbf16>, vector<2x8x8xf32> -> vector<2x8x8xf32>
    "tpu.trace_stop"() : () -> ()
    %115 = vector.shape_cast %114 : vector<2x8x8xf32> to vector<16x8xf32>
    %c3 = arith.constant 3 : index
    %c0_54 = arith.constant 0 : index
    %c0_55 = arith.constant 0 : index
    %116 = vector.load %arg3[%c3, %c0_54, %c0_55] : memref<4x32x8xbf16, #tpu.memory_space<vmem>>, vector<1x32x8xbf16>
    %117 = vector.shape_cast %116 : vector<1x32x8xbf16> to vector<32x8xbf16>
    %cst_56 = arith.constant dense<0.000000e+00> : vector<16x8xf32>
    %118 = tpu.matmul %2, %117, %cst_56 {dimension_numbers = #tpu.dot_dimension_numbers<[1], [0], [0], [1], [0, 0, 1, 1], [], []>} : vector<16x32xbf16>, vector<32x8xbf16>, vector<16x8xf32> -> vector<16x8xf32>
    %c3_57 = arith.constant 3 : index
    %c0_58 = arith.constant 0 : index
    %c0_59 = arith.constant 0 : index
    %119 = vector.load %arg4[%c3_57, %c0_58, %c0_59] : memref<4x32x8xbf16, #tpu.memory_space<vmem>>, vector<1x32x8xbf16>
    %120 = vector.shape_cast %119 : vector<1x32x8xbf16> to vector<32x8xbf16>
    %cst_60 = arith.constant dense<0.000000e+00> : vector<16x8xf32>
    %121 = tpu.matmul %2, %120, %cst_60 {dimension_numbers = #tpu.dot_dimension_numbers<[1], [0], [0], [1], [0, 0, 1, 1], [], []>} : vector<16x32xbf16>, vector<32x8xbf16>, vector<16x8xf32> -> vector<16x8xf32>
    %c3_61 = arith.constant 3 : index
    %c0_62 = arith.constant 0 : index
    %c0_63 = arith.constant 0 : index
    %122 = vector.load %arg5[%c3_61, %c0_62, %c0_63] : memref<4x32x8xbf16, #tpu.memory_space<vmem>>, vector<1x32x8xbf16>
    %123 = vector.shape_cast %122 : vector<1x32x8xbf16> to vector<32x8xbf16>
    %cst_64 = arith.constant dense<0.000000e+00> : vector<16x8xf32>
    %124 = tpu.matmul %2, %123, %cst_64 {dimension_numbers = #tpu.dot_dimension_numbers<[1], [0], [0], [1], [0, 0, 1, 1], [], []>} : vector<16x32xbf16>, vector<32x8xbf16>, vector<16x8xf32> -> vector<16x8xf32>
    %125 = vector.shape_cast %118 : vector<16x8xf32> to vector<2x8x8xf32>
    %126 = arith.truncf %125 : vector<2x8x8xf32> to vector<2x8x8xbf16>
    %127 = vector.shape_cast %121 : vector<16x8xf32> to vector<2x8x8xf32>
    %128 = arith.truncf %127 : vector<2x8x8xf32> to vector<2x8x8xbf16>
    %129 = vector.shape_cast %124 : vector<16x8xf32> to vector<2x8x8xf32>
    %130 = arith.truncf %129 : vector<2x8x8xf32> to vector<2x8x8xbf16>
    "tpu.trace_start"() <{level = 10 : i32, message = "bqd,bkd->bqk"}> : () -> ()
    %cst_65 = arith.constant dense<0.000000e+00> : vector<2x8x8xf32>
    %131 = tpu.matmul %126, %128, %cst_65 {dimension_numbers = #tpu.dot_dimension_numbers<[2], [2], [1], [1], [0, 0, 0, 1, 1, 1], [0], [0]>} : vector<2x8x8xbf16>, vector<2x8x8xbf16>, vector<2x8x8xf32> -> vector<2x8x8xf32>
    "tpu.trace_stop"() : () -> ()
    %cst_66 = arith.constant 0.353553385 : f32
    %132 = vector.broadcast %cst_66 : f32 to vector<2x8x8xf32>
    %133 = arith.mulf %131, %132 : vector<2x8x8xf32>
    %cst_67 = arith.constant -1.000000e+06 : f32
    %134 = vector.broadcast %cst_67 : f32 to vector<2x8x8xf32>
    %135 = arith.select %16, %133, %134 : vector<2x8x8xi1>, vector<2x8x8xf32>
    %cst_68 = arith.constant dense<0xFF800000> : vector<2x8xf32>
    %136 = vector.multi_reduction <maximumf>, %135, %cst_68 [2] : vector<2x8x8xf32> to vector<2x8xf32>
    %137 = vector.shape_cast %136 : vector<2x8xf32> to vector<2x8x1xf32>
    %138 = vector.broadcast %137 : vector<2x8x1xf32> to vector<2x8x8xf32>
    %139 = arith.subf %135, %138 : vector<2x8x8xf32>
    %140 = math.exp %139 : vector<2x8x8xf32>
    %cst_69 = arith.constant dense<0.000000e+00> : vector<2x8xf32>
    %141 = vector.multi_reduction <add>, %140, %cst_69 [2] : vector<2x8x8xf32> to vector<2x8xf32>
    %142 = vector.shape_cast %141 : vector<2x8xf32> to vector<2x8x1xf32>
    %143 = tpu.reciprocal %142 {approx = true} : vector<2x8x1xf32> -> vector<2x8x1xf32>
    %144 = vector.broadcast %143 : vector<2x8x1xf32> to vector<2x8x8xf32>
    %145 = arith.mulf %140, %144 : vector<2x8x8xf32>
    %146 = arith.truncf %145 : vector<2x8x8xf32> to vector<2x8x8xbf16>
    "tpu.trace_start"() <{level = 10 : i32, message = "bqk,bkd->bqd"}> : () -> ()
    %cst_70 = arith.constant dense<0.000000e+00> : vector<2x8x8xf32>
    %147 = tpu.matmul %146, %130, %cst_70 {dimension_numbers = #tpu.dot_dimension_numbers<[2], [1], [1], [2], [0, 0, 0, 1, 1, 2], [0], [0]>} : vector<2x8x8xbf16>, vector<2x8x8xbf16>, vector<2x8x8xf32> -> vector<2x8x8xf32>
    "tpu.trace_stop"() : () -> ()
    %148 = vector.shape_cast %147 : vector<2x8x8xf32> to vector<16x8xf32>
    %149 = tpu.concatenate %49, %82, %115, %148 in 1 : vector<16x8xf32>, vector<16x8xf32>, vector<16x8xf32>, vector<16x8xf32> -> vector<16x32xf32>
    %150 = arith.truncf %149 : vector<16x32xf32> to vector<16x32xbf16>
    %c0_71 = arith.constant 0 : index
    %c0_72 = arith.constant 0 : index
    %151 = vector.load %arg6[%c0_71, %c0_72] : memref<32x32xbf16, #tpu.memory_space<vmem>>, vector<32x32xbf16>
    %cst_73 = arith.constant dense<0.000000e+00> : vector<16x32xf32>
    %152 = tpu.matmul %150, %151, %cst_73 {dimension_numbers = #tpu.dot_dimension_numbers<[1], [0], [0], [1], [0, 0, 1, 1], [], []>} : vector<16x32xbf16>, vector<32x32xbf16>, vector<16x32xf32> -> vector<16x32xf32>
    %153 = arith.addf %152, %1 : vector<16x32xf32>
    %c0_74 = arith.constant 0 : index
    %c0_75 = arith.constant 0 : index
    %154 = vector.load %arg7[%c0_74, %c0_75] : memref<1x32xf32, #tpu.memory_space<vmem>>, vector<1x32xf32>
    %c0_76 = arith.constant 0 : index
    %c0_77 = arith.constant 0 : index
    %155 = vector.load %arg8[%c0_76, %c0_77] : memref<1x32xf32, #tpu.memory_space<vmem>>, vector<1x32xf32>
    %cst_78 = arith.constant dense<0.000000e+00> : vector<16xf32>
    %156 = vector.multi_reduction <add>, %153, %cst_78 [1] : vector<16x32xf32> to vector<16xf32>
    %157 = vector.shape_cast %156 : vector<16xf32> to vector<16x1xf32>
    %cst_79 = arith.constant 3.200000e+01 : f32
    %158 = vector.broadcast %cst_79 : f32 to vector<16x1xf32>
    %159 = arith.divf %157, %158 : vector<16x1xf32>
    %160 = vector.broadcast %159 : vector<16x1xf32> to vector<16x32xf32>
    %161 = arith.subf %153, %160 : vector<16x32xf32>
    %162 = arith.mulf %161, %161 : vector<16x32xf32>
    %cst_80 = arith.constant dense<0.000000e+00> : vector<16xf32>
    %163 = vector.multi_reduction <add>, %162, %cst_80 [1] : vector<16x32xf32> to vector<16xf32>
    %164 = vector.shape_cast %163 : vector<16xf32> to vector<16x1xf32>
    %cst_81 = arith.constant 3.200000e+01 : f32
    %165 = vector.broadcast %cst_81 : f32 to vector<16x1xf32>
    %166 = arith.divf %164, %165 : vector<16x1xf32>
    %167 = vector.broadcast %159 : vector<16x1xf32> to vector<16x32xf32>
    %168 = arith.subf %153, %167 : vector<16x32xf32>
    %cst_82 = arith.constant 9.99999974E-6 : f32
    %169 = vector.broadcast %cst_82 : f32 to vector<16x1xf32>
    %170 = arith.addf %166, %169 : vector<16x1xf32>
    %171 = math.rsqrt %170 : vector<16x1xf32>
    %172 = vector.broadcast %171 : vector<16x1xf32> to vector<16x32xf32>
    %173 = arith.mulf %168, %172 : vector<16x32xf32>
    %174 = vector.broadcast %154 : vector<1x32xf32> to vector<16x32xf32>
    %175 = arith.mulf %173, %174 : vector<16x32xf32>
    %176 = vector.broadcast %155 : vector<1x32xf32> to vector<16x32xf32>
    %177 = arith.addf %175, %176 : vector<16x32xf32>
    %178 = arith.truncf %177 : vector<16x32xf32> to vector<16x32xbf16>
    %c0_83 = arith.constant 0 : index
    %c0_84 = arith.constant 0 : index
    %179 = vector.load %arg9[%c0_83, %c0_84] : memref<32x64xbf16, #tpu.memory_space<vmem>>, vector<32x64xbf16>
    %cst_85 = arith.constant dense<0.000000e+00> : vector<16x64xf32>
    %180 = tpu.matmul %178, %179, %cst_85 {dimension_numbers = #tpu.dot_dimension_numbers<[1], [0], [0], [1], [0, 0, 1, 1], [], []>} : vector<16x32xbf16>, vector<32x64xbf16>, vector<16x64xf32> -> vector<16x64xf32>
    %c0_86 = arith.constant 0 : index
    %c0_87 = arith.constant 0 : index
    %181 = vector.load %arg10[%c0_86, %c0_87] : memref<1x64xf32, #tpu.memory_space<vmem>>, vector<1x64xf32>
    %182 = vector.broadcast %181 : vector<1x64xf32> to vector<16x64xf32>
    %183 = arith.addf %180, %182 : vector<16x64xf32>
    %cst_88 = arith.constant 0.000000e+00 : f32
    %184 = vector.broadcast %cst_88 : f32 to vector<16x64xf32>
    %185 = arith.maximumf %183, %184 : vector<16x64xf32>
    %186 = arith.truncf %185 : vector<16x64xf32> to vector<16x64xbf16>
    %c0_89 = arith.constant 0 : index
    %c0_90 = arith.constant 0 : index
    %187 = vector.load %arg11[%c0_89, %c0_90] : memref<64x32xbf16, #tpu.memory_space<vmem>>, vector<64x32xbf16>
    %cst_91 = arith.constant dense<0.000000e+00> : vector<16x32xf32>
    %188 = tpu.matmul %186, %187, %cst_91 {dimension_numbers = #tpu.dot_dimension_numbers<[1], [0], [0], [1], [0, 0, 1, 1], [], []>} : vector<16x64xbf16>, vector<64x32xbf16>, vector<16x32xf32> -> vector<16x32xf32>
    %c0_92 = arith.constant 0 : index
    %c0_93 = arith.constant 0 : index
    %189 = vector.load %arg12[%c0_92, %c0_93] : memref<1x32xf32, #tpu.memory_space<vmem>>, vector<1x32xf32>
    %190 = vector.broadcast %189 : vector<1x32xf32> to vector<16x32xf32>
    %191 = arith.addf %188, %190 : vector<16x32xf32>
    %192 = arith.addf %191, %177 : vector<16x32xf32>
    %c0_94 = arith.constant 0 : index
    %c0_95 = arith.constant 0 : index
    %193 = vector.load %arg13[%c0_94, %c0_95] : memref<1x32xf32, #tpu.memory_space<vmem>>, vector<1x32xf32>
    %c0_96 = arith.constant 0 : index
    %c0_97 = arith.constant 0 : index
    %194 = vector.load %arg14[%c0_96, %c0_97] : memref<1x32xf32, #tpu.memory_space<vmem>>, vector<1x32xf32>
    %cst_98 = arith.constant dense<0.000000e+00> : vector<16xf32>
    %195 = vector.multi_reduction <add>, %192, %cst_98 [1] : vector<16x32xf32> to vector<16xf32>
    %196 = vector.shape_cast %195 : vector<16xf32> to vector<16x1xf32>
    %cst_99 = arith.constant 3.200000e+01 : f32
    %197 = vector.broadcast %cst_99 : f32 to vector<16x1xf32>
    %198 = arith.divf %196, %197 : vector<16x1xf32>
    %199 = vector.broadcast %198 : vector<16x1xf32> to vector<16x32xf32>
    %200 = arith.subf %192, %199 : vector<16x32xf32>
    %201 = arith.mulf %200, %200 : vector<16x32xf32>
    %cst_100 = arith.constant dense<0.000000e+00> : vector<16xf32>
    %202 = vector.multi_reduction <add>, %201, %cst_100 [1] : vector<16x32xf32> to vector<16xf32>
    %203 = vector.shape_cast %202 : vector<16xf32> to vector<16x1xf32>
    %cst_101 = arith.constant 3.200000e+01 : f32
    %204 = vector.broadcast %cst_101 : f32 to vector<16x1xf32>
    %205 = arith.divf %203, %204 : vector<16x1xf32>
    %206 = vector.broadcast %198 : vector<16x1xf32> to vector<16x32xf32>
    %207 = arith.subf %192, %206 : vector<16x32xf32>
    %cst_102 = arith.constant 9.99999974E-6 : f32
    %208 = vector.broadcast %cst_102 : f32 to vector<16x1xf32>
    %209 = arith.addf %205, %208 : vector<16x1xf32>
    %210 = math.rsqrt %209 : vector<16x1xf32>
    %211 = vector.broadcast %210 : vector<16x1xf32> to vector<16x32xf32>
    %212 = arith.mulf %207, %211 : vector<16x32xf32>
    %213 = vector.broadcast %193 : vector<1x32xf32> to vector<16x32xf32>
    %214 = arith.mulf %212, %213 : vector<16x32xf32>
    %215 = vector.broadcast %194 : vector<1x32xf32> to vector<16x32xf32>
    %216 = arith.addf %214, %215 : vector<16x32xf32>
    %217 = vector.shape_cast %216 : vector<16x32xf32> to vector<2x8x32xf32>
    %c0_103 = arith.constant 0 : index
    %c0_104 = arith.constant 0 : index
    %c0_105 = arith.constant 0 : index
    %218 = vector.load %arg15[%c0_103, %c0_104, %c0_105] : memref<2x8x32xf32, #tpu.memory_space<vmem>>, vector<2x8x32xf32>
    tpu.vector_store %arg15[%c0_103, %c0_104, %c0_105], %217 {strides = array<i32>} : memref<2x8x32xf32, #tpu.memory_space<vmem>>, vector<2x8x32xf32>,
    return
  }
  func.func @transform_0(%arg0: i32, %arg1: memref<2xi32, #tpu.memory_space<smem>>) -> (i32, i32, i32) {
    %c0_i32 = arith.constant 0 : i32
    %c0_i32_0 = arith.constant 0 : i32
    %c0_i32_1 = arith.constant 0 : i32
    return %arg0, %c0_i32, %c0_i32_0 : i32, i32, i32
  }
  func.func @transform_1(%arg0: i32, %arg1: memref<2xi32, #tpu.memory_space<smem>>) -> (i32, i32, i32) {
    %c0_i32 = arith.constant 0 : i32
    %c0_i32_0 = arith.constant 0 : i32
    %c0_i32_1 = arith.constant 0 : i32
    %c0_i32_2 = arith.constant 0 : i32
    return %c0_i32, %c0_i32_0, %c0_i32_1 : i32, i32, i32
  }
  func.func @transform_2(%arg0: i32, %arg1: memref<2xi32, #tpu.memory_space<smem>>) -> (i32, i32, i32) {
    %c0_i32 = arith.constant 0 : i32
    %c0_i32_0 = arith.constant 0 : i32
    %c0_i32_1 = arith.constant 0 : i32
    %c0_i32_2 = arith.constant 0 : i32
    return %c0_i32, %c0_i32_0, %c0_i32_1 : i32, i32, i32
  }
  func.func @transform_3(%arg0: i32, %arg1: memref<2xi32, #tpu.memory_space<smem>>) -> (i32, i32, i32) {
    %c0_i32 = arith.constant 0 : i32
    %c0_i32_0 = arith.constant 0 : i32
    %c0_i32_1 = arith.constant 0 : i32
    %c0_i32_2 = arith.constant 0 : i32
    return %c0_i32, %c0_i32_0, %c0_i32_1 : i32, i32, i32
  }
  func.func @transform_4(%arg0: i32, %arg1: memref<2xi32, #tpu.memory_space<smem>>) -> (i32, i32) {
    %c0_i32 = arith.constant 0 : i32
    %c0_i32_0 = arith.constant 0 : i32
    %c0_i32_1 = arith.constant 0 : i32
    return %c0_i32, %c0_i32_0 : i32, i32
  }
  func.func @transform_5(%arg0: i32, %arg1: memref<2xi32, #tpu.memory_space<smem>>) -> (i32, i32) {
    %c0_i32 = arith.constant 0 : i32
    %c0_i32_0 = arith.constant 0 : i32
    %c0_i32_1 = arith.constant 0 : i32
    return %c0_i32, %c0_i32_0 : i32, i32
  }
  func.func @transform_6(%arg0: i32, %arg1: memref<2xi32, #tpu.memory_space<smem>>) -> (i32, i32) {
    %c0_i32 = arith.constant 0 : i32
    %c0_i32_0 = arith.constant 0 : i32
    %c0_i32_1 = arith.constant 0 : i32
    return %c0_i32, %c0_i32_0 : i32, i32
  }
  func.func @transform_7(%arg0: i32, %arg1: memref<2xi32, #tpu.memory_space<smem>>) -> (i32, i32) {
    %c0_i32 = arith.constant 0 : i32
    %c0_i32_0 = arith.constant 0 : i32
    %c0_i32_1 = arith.constant 0 : i32
    return %c0_i32, %c0_i32_0 : i32, i32
  }
  func.func @transform_8(%arg0: i32, %arg1: memref<2xi32, #tpu.memory_space<smem>>) -> (i32, i32) {
    %c0_i32 = arith.constant 0 : i32
    %c0_i32_0 = arith.constant 0 : i32
    %c0_i32_1 = arith.constant 0 : i32
    return %c0_i32, %c0_i32_0 : i32, i32
  }
  func.func @transform_9(%arg0: i32, %arg1: memref<2xi32, #tpu.memory_space<smem>>) -> (i32, i32) {
    %c0_i32 = arith.constant 0 : i32
    %c0_i32_0 = arith.constant 0 : i32
    %c0_i32_1 = arith.constant 0 : i32
    return %c0_i32, %c0_i32_0 : i32, i32
  }
  func.func @transform_10(%arg0: i32, %arg1: memref<2xi32, #tpu.memory_space<smem>>) -> (i32, i32) {
    %c0_i32 = arith.constant 0 : i32
    %c0_i32_0 = arith.constant 0 : i32
    %c0_i32_1 = arith.constant 0 : i32
    return %c0_i32, %c0_i32_0 : i32, i32
  }
  func.func @transform_11(%arg0: i32, %arg1: memref<2xi32, #tpu.memory_space<smem>>) -> (i32, i32) {
    %c0_i32 = arith.constant 0 : i32
    %c0_i32_0 = arith.constant 0 : i32
    %c0_i32_1 = arith.constant 0 : i32
    return %c0_i32, %c0_i32_0 : i32, i32
  }
  func.func @transform_12(%arg0: i32, %arg1: memref<2xi32, #tpu.memory_space<smem>>) -> (i32, i32) {
    %c0_i32 = arith.constant 0 : i32
    %c0_i32_0 = arith.constant 0 : i32
    %c0_i32_1 = arith.constant 0 : i32
    return %c0_i32, %c0_i32_0 : i32, i32
  }
  func.func @transform_13(%arg0: i32, %arg1: memref<2xi32, #tpu.memory_space<smem>>) -> (i32, i32, i32) {
    %c0_i32 = arith.constant 0 : i32
    %c0_i32_0 = arith.constant 0 : i32
    %c0_i32_1 = arith.constant 0 : i32
    return %arg0, %c0_i32, %c0_i32_0 : i32, i32, i32
  }
}

</mosaic_0001>

<llo_original>
// kernel: tpu_custom_call.1
$region0: #{tpu_custom_call.1}
  #allocation0 [shape = 'u32[]', space=smem, size = 0x4, offset = 0x4, fixed_abs, tag = 'smem constant byte address 0x4 - core index']
  #allocation1 [shape = 'u32[144,128]{1,0:T(1,128)}', space=vmem, size = 0x12000, scoped, tag = 'internal scratch']
  #allocation2 [shape = 's32[1]{0}', space=sflag, size = 0x4, scoped, tag = 'scoped memory for tpu_custom_call.1']
  #allocation3 [shape = 'u8[512]{0}', space=smem, size = 0x200, scoped, tag = 'prefetched SMEM operand 0']
  %s0 = inlined_call_operand.vmem [shape: s32[2], index: 0, kind: input, shape index: {}]
  %s1 = inlined_call_operand.vmem [shape: f32[2,8,32], index: 1, kind: input, shape index: {}]
  %s2 = inlined_call_operand.vmem [shape: bf16[4,32,8], index: 2, kind: input, shape index: {}]
  %s3 = inlined_call_operand.vmem [shape: bf16[4,32,8], index: 3, kind: input, shape index: {}]
  %s4 = inlined_call_operand.vmem [shape: bf16[4,32,8], index: 4, kind: input, shape index: {}]
  %s5 = inlined_call_operand.vmem [shape: bf16[32,32], index: 5, kind: input, shape index: {}]
  %s6 = inlined_call_operand.vmem [shape: f32[1,32], index: 6, kind: input, shape index: {}]
  %s7 = inlined_call_operand.vmem [shape: f32[1,32], index: 7, kind: input, shape index: {}]
  %s8 = inlined_call_operand.vmem [shape: bf16[32,64], index: 8, kind: input, shape index: {}]
  %s9 = inlined_call_operand.vmem [shape: f32[1,64], index: 9, kind: input, shape index: {}]
  %s10 = inlined_call_operand.vmem [shape: bf16[64,32], index: 10, kind: input, shape index: {}]
  %s11 = inlined_call_operand.vmem [shape: f32[1,32], index: 11, kind: input, shape index: {}]
  %s12 = inlined_call_operand.vmem [shape: f32[1,32], index: 12, kind: input, shape index: {}]
  %s13 = inlined_call_operand.vmem [shape: f32[1,32], index: 13, kind: input, shape index: {}]
  %s14 = inlined_call_operand.hbm [shape: f32[2,8,32], index: 14, kind: output, shape index: {}]
  %s15 = sld [smem:[#allocation0]]
  $region62: #{tpu_custom_call.1} parent=0
    _
  %s17 = ssub.s32 1, %s15
  %s18 = scalar_select 0, %s17, %s15
  %s19 = sshll.u32 %s0, 4
  %s20 = int_to_ptr.vmem [resolvable:$true] %s19
  %22 = dma.vmem_to_smem %s20, 16, [#allocation3], [#allocation2]
  %23 = dma.done [#allocation2], 16
  %24 = sfence
  $region1: #{tpu_custom_call.1} parent=0
    #allocation4 [shape = 'u8[8192]{0}', space=vmem, size = 0x2000, scoped, tag = 'output window, operand 0, single buffered']
    #allocation5 [shape = 's32[1]{0}', space=sflag, size = 0x4, scoped, tag = 'scoped memory for tpu_custom_call.1']
    %25 = vsyncpa [#allocation5], 0
    // Predicated region
    $region2: #{tpu_custom_call.1} parent=1 // pred_check
      _
    $region3: #{tpu_custom_call.1} parent=1 // pred_check_branch
      %27 = sbr.rel (0) target = $region5
    $region4: #{tpu_custom_call.1} parent=1 // pred_region
      _
    $region5: #{tpu_custom_call.1} parent=1 // pred_fallthru
      _
    // Predicated region
    $region6: #{tpu_custom_call.1} parent=1 // pred_check
      _
    $region7: #{tpu_custom_call.1} parent=1 // pred_check_branch
      %29 = sbr.rel (0) target = $region9
    $region8: #{tpu_custom_call.1} parent=1 // pred_region
      _
    $region9: #{tpu_custom_call.1} parent=1 // pred_fallthru
      _
    // Predicated region
    $region10: #{tpu_custom_call.1} parent=1 // pred_check
      _
    $region11: #{tpu_custom_call.1} parent=1 // pred_check_branch
      %31 = sbr.rel (0) target = $region13
    $region12: #{tpu_custom_call.1} parent=1 // pred_region
      _
    $region13: #{tpu_custom_call.1} parent=1 // pred_fallthru
      _
    // Predicated region
    $region14: #{tpu_custom_call.1} parent=1 // pred_check
      _
    $region15: #{tpu_custom_call.1} parent=1 // pred_check_branch
      %33 = sbr.rel (0) target = $region17
    $region16: #{tpu_custom_call.1} parent=1 // pred_region
      _
    $region17: #{tpu_custom_call.1} parent=1 // pred_fallthru
      _
    // Predicated region
    $region18: #{tpu_custom_call.1} parent=1 // pred_check
      _
    $region19: #{tpu_custom_call.1} parent=1 // pred_check_branch
      %35 = sbr.rel (0) target = $region21
    $region20: #{tpu_custom_call.1} parent=1 // pred_region
      _
    $region21: #{tpu_custom_call.1} parent=1 // pred_fallthru
      _
    // Predicated region
    $region22: #{tpu_custom_call.1} parent=1 // pred_check
      _
    $region23: #{tpu_custom_call.1} parent=1 // pred_check_branch
      %37 = sbr.rel (0) target = $region25
    $region24: #{tpu_custom_call.1} parent=1 // pred_region
      _
    $region25: #{tpu_custom_call.1} parent=1 // pred_fallthru
      _
    // Predicated region
    $region26: #{tpu_custom_call.1} parent=1 // pred_check
      _
    $region27: #{tpu_custom_call.1} parent=1 // pred_check_branch
      %39 = sbr.rel (0) target = $region29
    $region28: #{tpu_custom_call.1} parent=1 // pred_region
      _
    $region29: #{tpu_custom_call.1} parent=1 // pred_fallthru
      _
    // Predicated region
    $region30: #{tpu_custom_call.1} parent=1 // pred_check
      _
    $region31: #{tpu_custom_call.1} parent=1 // pred_check_branch
      %41 = sbr.rel (0) target = $region33
    $region32: #{tpu_custom_call.1} parent=1 // pred_region
      _
    $region33: #{tpu_custom_call.1} parent=1 // pred_fallthru
      _
    // Predicated region
    $region34: #{tpu_custom_call.1} parent=1 // pred_check
      _
    $region35: #{tpu_custom_call.1} parent=1 // pred_check_branch
      %43 = sbr.rel (0) target = $region37
    $region36: #{tpu_custom_call.1} parent=1 // pred_region
      _
    $region37: #{tpu_custom_call.1} parent=1 // pred_fallthru
      _
    // Predicated region
    $region38: #{tpu_custom_call.1} parent=1 // pred_check
      _
    $region39: #{tpu_custom_call.1} parent=1 // pred_check_branch
      %45 = sbr.rel (0) target = $region41
    $region40: #{tpu_custom_call.1} parent=1 // pred_region
      _
    $region41: #{tpu_custom_call.1} parent=1 // pred_fallthru
      _
    // Predicated region
    $region42: #{tpu_custom_call.1} parent=1 // pred_check
      _
    $region43: #{tpu_custom_call.1} parent=1 // pred_check_branch
      %47 = sbr.rel (0) target = $region45
    $region44: #{tpu_custom_call.1} parent=1 // pred_region
      _
    $region45: #{tpu_custom_call.1} parent=1 // pred_fallthru
      _
    // Predicated region
    $region46: #{tpu_custom_call.1} parent=1 // pred_check
      _
    $region47: #{tpu_custom_call.1} parent=1 // pred_check_branch
      %49 = sbr.rel (0) target = $region49
    $region48: #{tpu_custom_call.1} parent=1 // pred_region
      _
    $region49: #{tpu_custom_call.1} parent=1 // pred_fallthru
      _
    // Predicated region
    $region50: #{tpu_custom_call.1} parent=1 // pred_check
      _
    $region51: #{tpu_custom_call.1} parent=1 // pred_check_branch
      %51 = sbr.rel (0) target = $region53
    $region52: #{tpu_custom_call.1} parent=1 // pred_region
      _
    $region53: #{tpu_custom_call.1} parent=1 // pred_fallthru
      _
    %v53 = vld [vmem:[%s1] sm:$0xff]
    %v54 = vld [vmem:[%s1 + $0x8] sm:$0xff]
    %v55 = vpack.c.bf16 %v54, %v53
    %v56 = vlaneseq
    %v57 = vand.u32 %v56, 127
    %s58 = smul.u32 0, 2
    %s59 = sld [smem:[#allocation3 + %s58]]
    %v60 = vstv %s59
    %vm61 = vcmp.lt.s32.totalorder %v57, %v60
    %s62 = sadd.s32 %s58, 1
    %s63 = sld [smem:[#allocation3 + %s62]]
    %v64 = vstv %s63
    %vm65 = vcmp.lt.s32.totalorder %v57, %v64
    %v66 = vld [vmem:[%s2] sm:$0xf]
    %v67 = vld [vmem:[%s2 + $0x4] sm:$0xf]
    %v68 = vld [vmem:[%s2 + $0x8] sm:$0xf]
    %v69 = vld [vmem:[%s2 + $0xc] sm:$0xf]
    %v74 = vunpack.c.l.b16 %v66
    %v75 = vunpack.c.l.b16 %v67
    %v76 = vunpack.c.l.b16 %v68
    %v77 = vunpack.c.l.b16 %v69
    %v78 = vpack.c.b16 %v75, %v74
    %v79 = vpack.c.b16 %v77, %v76
    %vm82 = vcmask 261120
    %v84 = vsel %vm82, %v55, 0
    %86 = vmatprep.subr.bf16.mxu0 0
    %87 = vmatpush1.bf16.msra.mxu0 %v78
    %88 = vmatprep.subr.bf16.mxu0 0
    %89 = vmatpush1.bf16.msra.mxu0 %v79
    %90 = vmatprep.subr.bf16.mxu0 0
    %91 = vmatpush1.bf16.msra.mxu0 0
    %92 = vmatprep.subr.bf16.mxu0 0
    %93 = vmatpush1.bf16.msra.mxu0 0
    %94 = vmatprep.subr.bf16.mxu0 0
    %95 = vmatpush1.bf16.msra.mxu0 0
    %96 = vmatprep.subr.bf16.mxu0 0
    %97 = vmatpush1.bf16.msra.mxu0 0
    %98 = vmatprep.subr.bf16.mxu0 0
    %99 = vmatpush1.bf16.msra.mxu0 0
    %100 = vmatprep.subr.bf16.mxu0 0
    %101 = vmatpush1.bf16.msra.mxu0 0
    %102 = vmatprep.subr.bf16.mxu0 0
    %103 = vmatpush1.bf16.msra.mxu0 0
    %104 = vmatprep.subr.bf16.mxu0 0
    %105 = vmatpush1.bf16.msra.mxu0 0
    %106 = vmatprep.subr.bf16.mxu0 0
    %107 = vmatpush1.bf16.msra.mxu0 0
    %108 = vmatprep.subr.bf16.mxu0 0
    %109 = vmatpush1.bf16.msra.mxu0 0
    %110 = vmatprep.subr.bf16.mxu0 0
    %111 = vmatpush1.bf16.msra.mxu0 0
    %112 = vmatprep.subr.bf16.mxu0 0
    %113 = vmatpush1.bf16.msra.mxu0 0
    %114 = vmatprep.subr.bf16.mxu0 0
    %115 = vmatpush1.bf16.msra.mxu0 0
    %116 = vmatprep.subr.bf16.mxu0 0
    %117 = vmatpush1.bf16.msra.mxu0 0
    %118 = vmatprep.mubr.bf16.mxu0 0
    %119 = vmatmul.mubr.bf16.gmra.mrb[0].mxu0 %v84
    %v120 = vpop.f32.mrb[0].mxu0
    %v121 = vadd.f32 0.0, %v120
    %v122 = vpop.f32.mrb[0].mxu0
    %v123 = vpop.f32.mrb[0].mxu0
    %v124 = vadd.f32 0.0, %v123
    %v125 = vpop.f32.mrb[0].mxu0
    %126 = vdwg.mxu0
    %v127 = vld [vmem:[%s3] sm:$0xf]
    %v128 = vld [vmem:[%s3 + $0x4] sm:$0xf]
    %v129 = vld [vmem:[%s3 + $0x8] sm:$0xf]
    %v130 = vld [vmem:[%s3 + $0xc] sm:$0xf]
    %v135 = vunpack.c.l.b16 %v127
    %v136 = vunpack.c.l.b16 %v128
    %v137 = vunpack.c.l.b16 %v129
    %v138 = vunpack.c.l.b16 %v130
    %v139 = vpack.c.b16 %v136, %v135
    %v140 = vpack.c.b16 %v138, %v137
    %143 = vmatprep.subr.bf16.mxu0 0
    %144 = vmatpush1.bf16.msra.mxu0 %v139
    %145 = vmatprep.subr.bf16.mxu0 0
    %146 = vmatpush1.bf16.msra.mxu0 %v140
    %147 = vmatprep.subr.bf16.mxu0 0
    %148 = vmatpush1.bf16.msra.mxu0 0
    %149 = vmatprep.subr.bf16.mxu0 0
    %150 = vmatpush1.bf16.msra.mxu0 0
    %151 = vmatprep.subr.bf16.mxu0 0
    %152 = vmatpush1.bf16.msra.mxu0 0
    %153 = vmatprep.subr.bf16.mxu0 0
    %154 = vmatpush1.bf16.msra.mxu0 0
    %155 = vmatprep.subr.bf16.mxu0 0
    %156 = vmatpush1.bf16.msra.mxu0 0
    %157 = vmatprep.subr.bf16.mxu0 0
    %158 = vmatpush1.bf16.msra.mxu0 0
    %159 = vmatprep.subr.bf16.mxu0 0
    %160 = vmatpush1.bf16.msra.mxu0 0
    %161 = vmatprep.subr.bf16.mxu0 0
    %162 = vmatpush1.bf16.msra.mxu0 0
    %163 = vmatprep.subr.bf16.mxu0 0
    %164 = vmatpush1.bf16.msra.mxu0 0
    %165 = vmatprep.subr.bf16.mxu0 0
    %166 = vmatpush1.bf16.msra.mxu0 0
    %167 = vmatprep.subr.bf16.mxu0 0
    %168 = vmatpush1.bf16.msra.mxu0 0
    %169 = vmatprep.subr.bf16.mxu0 0
    %170 = vmatpush1.bf16.msra.mxu0 0
    %171 = vmatprep.subr.bf16.mxu0 0
    %172 = vmatpush1.bf16.msra.mxu0 0
    %173 = vmatprep.subr.bf16.mxu0 0
    %174 = vmatpush1.bf16.msra.mxu0 0
    %175 = vmatprep.mubr.bf16.mxu0 0
    %176 = vmatmul.mubr.bf16.gmra.mrb[0].mxu0 %v84
    %v177 = vpop.f32.mrb[0].mxu0
    %v178 = vadd.f32 0.0, %v177
    %v179 = vpop.f32.mrb[0].mxu0
    %v180 = vpop.f32.mrb[0].mxu0
    %v181 = vadd.f32 0.0, %v180
    %v182 = vpop.f32.mrb[0].mxu0
    %183 = vdwg.mxu0
    %v184 = vld [vmem:[%s4] sm:$0xf]
    %v185 = vld [vmem:[%s4 + $0x4] sm:$0xf]
    %v186 = vld [vmem:[%s4 + $0x8] sm:$0xf]
    %v187 = vld [vmem:[%s4 + $0xc] sm:$0xf]
    %v192 = vunpack.c.l.b16 %v184
    %v193 = vunpack.c.l.b16 %v185
    %v194 = vunpack.c.l.b16 %v186
    %v195 = vunpack.c.l.b16 %v187
    %v196 = vpack.c.b16 %v193, %v192
    %v197 = vpack.c.b16 %v195, %v194
    %200 = vmatprep.subr.bf16.mxu0 0
    %201 = vmatpush1.bf16.msra.mxu0 %v196
    %202 = vmatprep.subr.bf16.mxu0 0
    %203 = vmatpush1.bf16.msra.mxu0 %v197
    %204 = vmatprep.subr.bf16.mxu0 0
    %205 = vmatpush1.bf16.msra.mxu0 0
    %206 = vmatprep.subr.bf16.mxu0 0
    %207 = vmatpush1.bf16.msra.mxu0 0
    %208 = vmatprep.subr.bf16.mxu0 0
    %209 = vmatpush1.bf16.msra.mxu0 0
    %210 = vmatprep.subr.bf16.mxu0 0
    %211 = vmatpush1.bf16.msra.mxu0 0
    %212 = vmatprep.subr.bf16.mxu0 0
    %213 = vmatpush1.bf16.msra.mxu0 0
    %214 = vmatprep.subr.bf16.mxu0 0
    %215 = vmatpush1.bf16.msra.mxu0 0
    %216 = vmatprep.subr.bf16.mxu0 0
    %217 = vmatpush1.bf16.msra.mxu0 0
    %218 = vmatprep.subr.bf16.mxu0 0
    %219 = vmatpush1.bf16.msra.mxu0 0
    %220 = vmatprep.subr.bf16.mxu0 0
    %221 = vmatpush1.bf16.msra.mxu0 0
    %222 = vmatprep.subr.bf16.mxu0 0
    %223 = vmatpush1.bf16.msra.mxu0 0
    %224 = vmatprep.subr.bf16.mxu0 0
    %225 = vmatpush1.bf16.msra.mxu0 0
    %226 = vmatprep.subr.bf16.mxu0 0
    %227 = vmatpush1.bf16.msra.mxu0 0
    %228 = vmatprep.subr.bf16.mxu0 0
    %229 = vmatpush1.bf16.msra.mxu0 0
    %230 = vmatprep.subr.bf16.mxu0 0
    %231 = vmatpush1.bf16.msra.mxu0 0
    %232 = vmatprep.mubr.bf16.mxu0 0
    %233 = vmatmul.mubr.bf16.gmra.mrb[0].mxu0 %v84
    %v234 = vpop.f32.mrb[0].mxu0
    %v235 = vadd.f32 0.0, %v234
    %v236 = vpop.f32.mrb[0].mxu0
    %v237 = vpop.f32.mrb[0].mxu0
    %v238 = vadd.f32 0.0, %v237
    %v239 = vpop.f32.mrb[0].mxu0
    %240 = vdwg.mxu0
    %v241 = vpack.c.bf16 %v121, %v121
    %v242 = vpack.c.bf16 %v124, %v124
    %v243 = vpack.c.bf16 %v178, %v178
    %v244 = vpack.c.bf16 %v181, %v181
    %v245 = vpack.c.bf16 %v235, %v235
    %v246 = vpack.c.bf16 %v238, %v238
    %vm247 = vcmask 64512
    %v249 = vsel %vm247, %v241, 0
    %v252 = vsel %vm247, %v243, 0
    %254 = vmatprep.subr.bf16.mxu0 0
    %255 = vmatpush1.bf16.xpose.msra.mxu0 %v252
    %256 = vmatprep.subr.bf16.mxu0 0
    %257 = vmatpush1.bf16.xpose.msra.mxu0 0
    %258 = vmatprep.subr.bf16.mxu0 0
    %259 = vmatpush1.bf16.xpose.msra.mxu0 0
    %260 = vmatprep.subr.bf16.mxu0 0
    %261 = vmatpush1.bf16.xpose.msra.mxu0 0
    %262 = vmatprep.subr.bf16.mxu0 0
    %263 = vmatpush1.bf16.xpose.msra.mxu0 0
    %264 = vmatprep.subr.bf16.mxu0 0
    %265 = vmatpush1.bf16.xpose.msra.mxu0 0
    %266 = vmatprep.subr.bf16.mxu0 0
    %267 = vmatpush1.bf16.xpose.msra.mxu0 0
    %268 = vmatprep.subr.bf16.mxu0 0
    %269 = vmatpush1.bf16.xpose.msra.mxu0 0
    %270 = vmatprep.subr.bf16.mxu0 0
    %271 = vmatpush1.bf16.xpose.msra.mxu0 0
    %272 = vmatprep.subr.bf16.mxu0 0
    %273 = vmatpush1.bf16.xpose.msra.mxu0 0
    %274 = vmatprep.subr.bf16.mxu0 0
    %275 = vmatpush1.bf16.xpose.msra.mxu0 0
    %276 = vmatprep.subr.bf16.mxu0 0
    %277 = vmatpush1.bf16.xpose.msra.mxu0 0
    %278 = vmatprep.subr.bf16.mxu0 0
    %279 = vmatpush1.bf16.xpose.msra.mxu0 0
    %280 = vmatprep.subr.bf16.mxu0 0
    %281 = vmatpush1.bf16.xpose.msra.mxu0 0
    %282 = vmatprep.subr.bf16.mxu0 0
    %283 = vmatpush1.bf16.xpose.msra.mxu0 0
    %284 = vmatprep.subr.bf16.mxu0 0
    %285 = vmatpush1.bf16.xpose.msra.mxu0 0
    %286 = vmatprep.mubr.bf16.mxu0 0
    %287 = vmatmul.mubr.bf16.gmra.mrb[0].mxu0 %v249
    %v288 = vpop.f32.mrb[0].mxu0
    %v289 = vadd.f32 0.0, %v288
    %v290 = vpop.f32.mrb[0].mxu0
    %v291 = vpop.f32.mrb[0].mxu0
    %v292 = vpop.f32.mrb[0].mxu0
    %293 = vdwg.mxu0
    %v295 = vsel %vm247, %v242, 0
    %v298 = vsel %vm247, %v244, 0
    %300 = vmatprep.subr.bf16.mxu0 0
    %301 = vmatpush1.bf16.xpose.msra.mxu0 %v298
    %302 = vmatprep.subr.bf16.mxu0 0
    %303 = vmatpush1.bf16.xpose.msra.mxu0 0
    %304 = vmatprep.subr.bf16.mxu0 0
    %305 = vmatpush1.bf16.xpose.msra.mxu0 0
    %306 = vmatprep.subr.bf16.mxu0 0
    %307 = vmatpush1.bf16.xpose.msra.mxu0 0
    %308 = vmatprep.subr.bf16.mxu0 0
    %309 = vmatpush1.bf16.xpose.msra.mxu0 0
    %310 = vmatprep.subr.bf16.mxu0 0
    %311 = vmatpush1.bf16.xpose.msra.mxu0 0
    %312 = vmatprep.subr.bf16.mxu0 0
    %313 = vmatpush1.bf16.xpose.msra.mxu0 0
    %314 = vmatprep.subr.bf16.mxu0 0
    %315 = vmatpush1.bf16.xpose.msra.mxu0 0
    %316 = vmatprep.subr.bf16.mxu0 0
    %317 = vmatpush1.bf16.xpose.msra.mxu0 0
    %318 = vmatprep.subr.bf16.mxu0 0
    %319 = vmatpush1.bf16.xpose.msra.mxu0 0
    %320 = vmatprep.subr.bf16.mxu0 0
    %321 = vmatpush1.bf16.xpose.msra.mxu0 0
    %322 = vmatprep.subr.bf16.mxu0 0
    %323 = vmatpush1.bf16.xpose.msra.mxu0 0
    %324 = vmatprep.subr.bf16.mxu0 0
    %325 = vmatpush1.bf16.xpose.msra.mxu0 0
    %326 = vmatprep.subr.bf16.mxu0 0
    %327 = vmatpush1.bf16.xpose.msra.mxu0 0
    %328 = vmatprep.subr.bf16.mxu0 0
    %329 = vmatpush1.bf16.xpose.msra.mxu0 0
    %330 = vmatprep.subr.bf16.mxu0 0
    %331 = vmatpush1.bf16.xpose.msra.mxu0 0
    %332 = vmatprep.mubr.bf16.mxu0 0
    %333 = vmatmul.mubr.bf16.gmra.mrb[0].mxu0 %v295
    %v334 = vpop.f32.mrb[0].mxu0
    %v335 = vadd.f32 0.0, %v334
    %v336 = vpop.f32.mrb[0].mxu0
    %v337 = vpop.f32.mrb[0].mxu0
    %v338 = vpop.f32.mrb[0].mxu0
    %339 = vdwg.mxu0
    %v340 = vmul.f32 %v289, 0.35355338
    %v341 = vmul.f32 %v335, 0.35355338
    %v342 = vsel %vm61, %v340, -1000000.0
    %v343 = vsel %vm65, %v341, -1000000.0
    %v344 = vsel %vm247, %v342, -inf
    %345 = vmax.xlane.f32.xlu0 %v344
    %v346 = vpop.xlane.xlu0 %345
    %v347 = vsel %vm247, %v343, -inf
    %348 = vmax.xlane.f32.xlu0 %v347
    %v349 = vpop.xlane.xlu0 %348
    %v350 = vsub.f32 %v342, %v346
    %v351 = vsub.f32 %v343, %v349
    %v352 = vmul.f32 %v350, 1.442695
    %v353 = vpow.pop %v352
    %v354 = vmul.f32 %v351, 1.442695
    %v355 = vpow.pop %v354
    %v356 = vsel %vm247, %v353, 0.0
    %357 = vadd.xlane.f32.xlu0 %v356
    %v358 = vpop.xlane.xlu0 %357
    %v359 = vsel %vm247, %v355, 0.0
    %360 = vadd.xlane.f32.xlu0 %v359
    %v361 = vpop.xlane.xlu0 %360
    %v362 = vrcp.pop %v358
    %v363 = vrcp.pop %v361
    %v364 = vmul.f32 %v353, %v362
    %v365 = vmul.f32 %v355, %v363
    %v366 = vpack.c.bf16 %v364, %v364
    %v367 = vpack.c.bf16 %v365, %v365
    %v369 = vsel %vm247, %v366, 0
    %vm371 = vcmask 1043456
    %v373 = vsel %vm371, %v245, 0
    %375 = vmatprep.subr.bf16.mxu0 0
    %376 = vmatpush1.bf16.msra.mxu0 %v373
    %377 = vmatprep.subr.bf16.mxu0 0
    %378 = vmatpush1.bf16.msra.mxu0 0
    %379 = vmatprep.subr.bf16.mxu0 0
    %380 = vmatpush1.bf16.msra.mxu0 0
    %381 = vmatprep.subr.bf16.mxu0 0
    %382 = vmatpush1.bf16.msra.mxu0 0
    %383 = vmatprep.subr.bf16.mxu0 0
    %384 = vmatpush1.bf16.msra.mxu0 0
    %385 = vmatprep.subr.bf16.mxu0 0
    %386 = vmatpush1.bf16.msra.mxu0 0
    %387 = vmatprep.subr.bf16.mxu0 0
    %388 = vmatpush1.bf16.msra.mxu0 0
    %389 = vmatprep.subr.bf16.mxu0 0
    %390 = vmatpush1.bf16.msra.mxu0 0
    %391 = vmatprep.subr.bf16.mxu0 0
    %392 = vmatpush1.bf16.msra.mxu0 0
    %393 = vmatprep.subr.bf16.mxu0 0
    %394 = vmatpush1.bf16.msra.mxu0 0
    %395 = vmatprep.subr.bf16.mxu0 0
    %396 = vmatpush1.bf16.msra.mxu0 0
    %397 = vmatprep.subr.bf16.mxu0 0
    %398 = vmatpush1.bf16.msra.mxu0 0
    %399 = vmatprep.subr.bf16.mxu0 0
    %400 = vmatpush1.bf16.msra.mxu0 0
    %401 = vmatprep.subr.bf16.mxu0 0
    %402 = vmatpush1.bf16.msra.mxu0 0
    %403 = vmatprep.subr.bf16.mxu0 0
    %404 = vmatpush1.bf16.msra.mxu0 0
    %405 = vmatprep.subr.bf16.mxu0 0
    %406 = vmatpush1.bf16.msra.mxu0 0
    %407 = vmatprep.mubr.bf16.mxu0 0
    %408 = vmatmul.mubr.bf16.gmra.mrb[0].mxu0 %v369
    %v409 = vpop.f32.mrb[0].mxu0
    %v410 = vadd.f32 0.0, %v409
    %v411 = vpop.f32.mrb[0].mxu0
    %v412 = vpop.f32.mrb[0].mxu0
    %v413 = vpop.f32.mrb[0].mxu0
    %414 = vdwg.mxu0
    %v416 = vsel %vm247, %v367, 0
    %v419 = vsel %vm371, %v246, 0
    %421 = vmatprep.subr.bf16.mxu0 0
    %422 = vmatpush1.bf16.msra.mxu0 %v419
    %423 = vmatprep.subr.bf16.mxu0 0
    %424 = vmatpush1.bf16.msra.mxu0 0
    %425 = vmatprep.subr.bf16.mxu0 0
    %426 = vmatpush1.bf16.msra.mxu0 0
    %427 = vmatprep.subr.bf16.mxu0 0
    %428 = vmatpush1.bf16.msra.mxu0 0
    %429 = vmatprep.subr.bf16.mxu0 0
    %430 = vmatpush1.bf16.msra.mxu0 0
    %431 = vmatprep.subr.bf16.mxu0 0
    %432 = vmatpush1.bf16.msra.mxu0 0
    %433 = vmatprep.subr.bf16.mxu0 0
    %434 = vmatpush1.bf16.msra.mxu0 0
    %435 = vmatprep.subr.bf16.mxu0 0
    %436 = vmatpush1.bf16.msra.mxu0 0
    %437 = vmatprep.subr.bf16.mxu0 0
    %438 = vmatpush1.bf16.msra.mxu0 0
    %439 = vmatprep.subr.bf16.mxu0 0
    %440 = vmatpush1.bf16.msra.mxu0 0
    %441 = vmatprep.subr.bf16.mxu0 0
    %442 = vmatpush1.bf16.msra.mxu0 0
    %443 = vmatprep.subr.bf16.mxu0 0
    %444 = vmatpush1.bf16.msra.mxu0 0
    %445 = vmatprep.subr.bf16.mxu0 0
    %446 = vmatpush1.bf16.msra.mxu0 0
    %447 = vmatprep.subr.bf16.mxu0 0
    %448 = vmatpush1.bf16.msra.mxu0 0
    %449 = vmatprep.subr.bf16.mxu0 0
    %450 = vmatpush1.bf16.msra.mxu0 0
    %451 = vmatprep.subr.bf16.mxu0 0
    %452 = vmatpush1.bf16.msra.mxu0 0
    %453 = vmatprep.mubr.bf16.mxu0 0
    %454 = vmatmul.mubr.bf16.gmra.mrb[0].mxu0 %v416
    %v455 = vpop.f32.mrb[0].mxu0
    %v456 = vadd.f32 0.0, %v455
    %v457 = vpop.f32.mrb[0].mxu0
    %v458 = vpop.f32.mrb[0].mxu0
    %v459 = vpop.f32.mrb[0].mxu0
    %460 = vdwg.mxu0
    %s461 = scalar_lea.vmem %s2, 16
    %v462 = vld [vmem:[%s461] sm:$0xf]
    %v463 = vld [vmem:[%s461 + $0x4] sm:$0xf]
    %v464 = vld [vmem:[%s461 + $0x8] sm:$0xf]
    %v465 = vld [vmem:[%s461 + $0xc] sm:$0xf]
    %v470 = vunpack.c.l.b16 %v462
    %v471 = vunpack.c.l.b16 %v463
    %v472 = vunpack.c.l.b16 %v464
    %v473 = vunpack.c.l.b16 %v465
    %v474 = vpack.c.b16 %v471, %v470
    %v475 = vpack.c.b16 %v473, %v472
    %478 = vmatprep.subr.bf16.mxu0 0
    %479 = vmatpush1.bf16.msra.mxu0 %v474
    %480 = vmatprep.subr.bf16.mxu0 0
    %481 = vmatpush1.bf16.msra.mxu0 %v475
    %482 = vmatprep.subr.bf16.mxu0 0
    %483 = vmatpush1.bf16.msra.mxu0 0
    %484 = vmatprep.subr.bf16.mxu0 0
    %485 = vmatpush1.bf16.msra.mxu0 0
    %486 = vmatprep.subr.bf16.mxu0 0
    %487 = vmatpush1.bf16.msra.mxu0 0
    %488 = vmatprep.subr.bf16.mxu0 0
    %489 = vmatpush1.bf16.msra.mxu0 0
    %490 = vmatprep.subr.bf16.mxu0 0
    %491 = vmatpush1.bf16.msra.mxu0 0
    %492 = vmatprep.subr.bf16.mxu0 0
    %493 = vmatpush1.bf16.msra.mxu0 0
    %494 = vmatprep.subr.bf16.mxu0 0
    %495 = vmatpush1.bf16.msra.mxu0 0
    %496 = vmatprep.subr.bf16.mxu0 0
    %497 = vmatpush1.bf16.msra.mxu0 0
    %498 = vmatprep.subr.bf16.mxu0 0
    %499 = vmatpush1.bf16.msra.mxu0 0
    %500 = vmatprep.subr.bf16.mxu0 0
    %501 = vmatpush1.bf16.msra.mxu0 0
    %502 = vmatprep.subr.bf16.mxu0 0
    %503 = vmatpush1.bf16.msra.mxu0 0
    %504 = vmatprep.subr.bf16.mxu0 0
    %505 = vmatpush1.bf16.msra.mxu0 0
    %506 = vmatprep.subr.bf16.mxu0 0
    %507 = vmatpush1.bf16.msra.mxu0 0
    %508 = vmatprep.subr.bf16.mxu0 0
    %509 = vmatpush1.bf16.msra.mxu0 0
    %510 = vmatprep.mubr.bf16.mxu0 0
    %511 = vmatmul.mubr.bf16.gmra.mrb[0].mxu0 %v84
    %v512 = vpop.f32.mrb[0].mxu0
    %v513 = vadd.f32 0.0, %v512
    %v514 = vpop.f32.mrb[0].mxu0
    %v515 = vpop.f32.mrb[0].mxu0
    %v516 = vadd.f32 0.0, %v515
    %v517 = vpop.f32.mrb[0].mxu0
    %518 = vdwg.mxu0
    %s519 = scalar_lea.vmem %s3, 16
    %v520 = vld [vmem:[%s519] sm:$0xf]
    %v521 = vld [vmem:[%s519 + $0x4] sm:$0xf]
    %v522 = vld [vmem:[%s519 + $0x8] sm:$0xf]
    %v523 = vld [vmem:[%s519 + $0xc] sm:$0xf]
    %v528 = vunpack.c.l.b16 %v520
    %v529 = vunpack.c.l.b16 %v521
    %v530 = vunpack.c.l.b16 %v522
    %v531 = vunpack.c.l.b16 %v523
    %v532 = vpack.c.b16 %v529, %v528
    %v533 = vpack.c.b16 %v531, %v530
    %536 = vmatprep.subr.bf16.mxu0 0
    %537 = vmatpush1.bf16.msra.mxu0 %v532
    %538 = vmatprep.subr.bf16.mxu0 0
    %539 = vmatpush1.bf16.msra.mxu0 %v533
    %540 = vmatprep.subr.bf16.mxu0 0
    %541 = vmatpush1.bf16.msra.mxu0 0
    %542 = vmatprep.subr.bf16.mxu0 0
    %543 = vmatpush1.bf16.msra.mxu0 0
    %544 = vmatprep.subr.bf16.mxu0 0
    %545 = vmatpush1.bf16.msra.mxu0 0
    %546 = vmatprep.subr.bf16.mxu0 0
    %547 = vmatpush1.bf16.msra.mxu0 0
    %548 = vmatprep.subr.bf16.mxu0 0
    %549 = vmatpush1.bf16.msra.mxu0 0
    %550 = vmatprep.subr.bf16.mxu0 0
    %551 = vmatpush1.bf16.msra.mxu0 0
    %552 = vmatprep.subr.bf16.mxu0 0
    %553 = vmatpush1.bf16.msra.mxu0 0
    %554 = vmatprep.subr.bf16.mxu0 0
    %555 = vmatpush1.bf16.msra.mxu0 0
    %556 = vmatprep.subr.bf16.mxu0 0
    %557 = vmatpush1.bf16.msra.mxu0 0
    %558 = vmatprep.subr.bf16.mxu0 0
    %559 = vmatpush1.bf16.msra.mxu0 0
    %560 = vmatprep.subr.bf16.mxu0 0
    %561 = vmatpush1.bf16.msra.mxu0 0
    %562 = vmatprep.subr.bf16.mxu0 0
    %563 = vmatpush1.bf16.msra.mxu0 0
    %564 = vmatprep.subr.bf16.mxu0 0
    %565 = vmatpush1.bf16.msra.mxu0 0
    %566 = vmatprep.subr.bf16.mxu0 0
    %567 = vmatpush1.bf16.msra.mxu0 0
    %568 = vmatprep.mubr.bf16.mxu0 0
    %569 = vmatmul.mubr.bf16.gmra.mrb[0].mxu0 %v84
    %v570 = vpop.f32.mrb[0].mxu0
    %v571 = vadd.f32 0.0, %v570
    %v572 = vpop.f32.mrb[0].mxu0
    %v573 = vpop.f32.mrb[0].mxu0
    %v574 = vadd.f32 0.0, %v573
    %v575 = vpop.f32.mrb[0].mxu0
    %576 = vdwg.mxu0
    %s577 = scalar_lea.vmem %s4, 16
    %v578 = vld [vmem:[%s577] sm:$0xf]
    %v579 = vld [vmem:[%s577 + $0x4] sm:$0xf]
    %v580 = vld [vmem:[%s577 + $0x8] sm:$0xf]
    %v581 = vld [vmem:[%s577 + $0xc] sm:$0xf]
    %v586 = vunpack.c.l.b16 %v578
    %v587 = vunpack.c.l.b16 %v579
    %v588 = vunpack.c.l.b16 %v580
    %v589 = vunpack.c.l.b16 %v581
    %v590 = vpack.c.b16 %v587, %v586
    %v591 = vpack.c.b16 %v589, %v588
    %594 = vmatprep.subr.bf16.mxu0 0
    %595 = vmatpush1.bf16.msra.mxu0 %v590
    %596 = vmatprep.subr.bf16.mxu0 0
    %597 = vmatpush1.bf16.msra.mxu0 %v591
    %598 = vmatprep.subr.bf16.mxu0 0
    %599 = vmatpush1.bf16.msra.mxu0 0
    %600 = vmatprep.subr.bf16.mxu0 0
    %601 = vmatpush1.bf16.msra.mxu0 0
    %602 = vmatprep.subr.bf16.mxu0 0
    %603 = vmatpush1.bf16.msra.mxu0 0
    %604 = vmatprep.subr.bf16.mxu0 0
    %605 = vmatpush1.bf16.msra.mxu0 0
    %606 = vmatprep.subr.bf16.mxu0 0
    %607 = vmatpush1.bf16.msra.mxu0 0
    %608 = vmatprep.subr.bf16.mxu0 0
    %609 = vmatpush1.bf16.msra.mxu0 0
    %610 = vmatprep.subr.bf16.mxu0 0
    %611 = vmatpush1.bf16.msra.mxu0 0
    %612 = vmatprep.subr.bf16.mxu0 0
    %613 = vmatpush1.bf16.msra.mxu0 0
    %614 = vmatprep.subr.bf16.mxu0 0
    %615 = vmatpush1.bf16.msra.mxu0 0
    %616 = vmatprep.subr.bf16.mxu0 0
    %617 = vmatpush1.bf16.msra.mxu0 0
    %618 = vmatprep.subr.bf16.mxu0 0
    %619 = vmatpush1.bf16.msra.mxu0 0
    %620 = vmatprep.subr.bf16.mxu0 0
    %621 = vmatpush1.bf16.msra.mxu0 0
    %622 = vmatprep.subr.bf16.mxu0 0
    %623 = vmatpush1.bf16.msra.mxu0 0
    %624 = vmatprep.subr.bf16.mxu0 0
    %625 = vmatpush1.bf16.msra.mxu0 0
    %626 = vmatprep.mubr.bf16.mxu0 0
    %627 = vmatmul.mubr.bf16.gmra.mrb[0].mxu0 %v84
    %v628 = vpop.f32.mrb[0].mxu0
    %v629 = vadd.f32 0.0, %v628
    %v630 = vpop.f32.mrb[0].mxu0
    %v631 = vpop.f32.mrb[0].mxu0
    %v632 = vadd.f32 0.0, %v631
    %v633 = vpop.f32.mrb[0].mxu0
    %634 = vdwg.mxu0
    %v635 = vpack.c.bf16 %v513, %v513
    %v636 = vpack.c.bf16 %v516, %v516
    %v637 = vpack.c.bf16 %v571, %v571
    %v638 = vpack.c.bf16 %v574, %v574
    %v639 = vpack.c.bf16 %v629, %v629
    %v640 = vpack.c.bf16 %v632, %v632
    %v642 = vsel %vm247, %v635, 0
    %v645 = vsel %vm247, %v637, 0
    %647 = vmatprep.subr.bf16.mxu0 0
    %648 = vmatpush1.bf16.xpose.msra.mxu0 %v645
    %649 = vmatprep.subr.bf16.mxu0 0
    %650 = vmatpush1.bf16.xpose.msra.mxu0 0
    %651 = vmatprep.subr.bf16.mxu0 0
    %652 = vmatpush1.bf16.xpose.msra.mxu0 0
    %653 = vmatprep.subr.bf16.mxu0 0
    %654 = vmatpush1.bf16.xpose.msra.mxu0 0
    %655 = vmatprep.subr.bf16.mxu0 0
    %656 = vmatpush1.bf16.xpose.msra.mxu0 0
    %657 = vmatprep.subr.bf16.mxu0 0
    %658 = vmatpush1.bf16.xpose.msra.mxu0 0
    %659 = vmatprep.subr.bf16.mxu0 0
    %660 = vmatpush1.bf16.xpose.msra.mxu0 0
    %661 = vmatprep.subr.bf16.mxu0 0
    %662 = vmatpush1.bf16.xpose.msra.mxu0 0
    %663 = vmatprep.subr.bf16.mxu0 0
    %664 = vmatpush1.bf16.xpose.msra.mxu0 0
    %665 = vmatprep.subr.bf16.mxu0 0
    %666 = vmatpush1.bf16.xpose.msra.mxu0 0
    %667 = vmatprep.subr.bf16.mxu0 0
    %668 = vmatpush1.bf16.xpose.msra.mxu0 0
    %669 = vmatprep.subr.bf16.mxu0 0
    %670 = vmatpush1.bf16.xpose.msra.mxu0 0
    %671 = vmatprep.subr.bf16.mxu0 0
    %672 = vmatpush1.bf16.xpose.msra.mxu0 0
    %673 = vmatprep.subr.bf16.mxu0 0
    %674 = vmatpush1.bf16.xpose.msra.mxu0 0
    %675 = vmatprep.subr.bf16.mxu0 0
    %676 = vmatpush1.bf16.xpose.msra.mxu0 0
    %677 = vmatprep.subr.bf16.mxu0 0
    %678 = vmatpush1.bf16.xpose.msra.mxu0 0
    %679 = vmatprep.mubr.bf16.mxu0 0
    %680 = vmatmul.mubr.bf16.gmra.mrb[0].mxu0 %v642
    %v681 = vpop.f32.mrb[0].mxu0
    %v682 = vadd.f32 0.0, %v681
    %v683 = vpop.f32.mrb[0].mxu0
    %v684 = vpop.f32.mrb[0].mxu0
    %v685 = vpop.f32.mrb[0].mxu0
    %686 = vdwg.mxu0
    %v688 = vsel %vm247, %v636, 0
    %v691 = vsel %vm247, %v638, 0
    %693 = vmatprep.subr.bf16.mxu0 0
    %694 = vmatpush1.bf16.xpose.msra.mxu0 %v691
    %695 = vmatprep.subr.bf16.mxu0 0
    %696 = vmatpush1.bf16.xpose.msra.mxu0 0
    %697 = vmatprep.subr.bf16.mxu0 0
    %698 = vmatpush1.bf16.xpose.msra.mxu0 0
    %699 = vmatprep.subr.bf16.mxu0 0
    %700 = vmatpush1.bf16.xpose.msra.mxu0 0
    %701 = vmatprep.subr.bf16.mxu0 0
    %702 = vmatpush1.bf16.xpose.msra.mxu0 0
    %703 = vmatprep.subr.bf16.mxu0 0
    %704 = vmatpush1.bf16.xpose.msra.mxu0 0
    %705 = vmatprep.subr.bf16.mxu0 0
    %706 = vmatpush1.bf16.xpose.msra.mxu0 0
    %707 = vmatprep.subr.bf16.mxu0 0
    %708 = vmatpush1.bf16.xpose.msra.mxu0 0
    %709 = vmatprep.subr.bf16.mxu0 0
    %710 = vmatpush1.bf16.xpose.msra.mxu0 0
    %711 = vmatprep.subr.bf16.mxu0 0
    %712 = vmatpush1.bf16.xpose.msra.mxu0 0
    %713 = vmatprep.subr.bf16.mxu0 0
    %714 = vmatpush1.bf16.xpose.msra.mxu0 0
    %715 = vmatprep.subr.bf16.mxu0 0
    %716 = vmatpush1.bf16.xpose.msra.mxu0 0
    %717 = vmatprep.subr.bf16.mxu0 0
    %718 = vmatpush1.bf16.xpose.msra.mxu0 0
    %719 = vmatprep.subr.bf16.mxu0 0
    %720 = vmatpush1.bf16.xpose.msra.mxu0 0
    %721 = vmatprep.subr.bf16.mxu0 0
    %722 = vmatpush1.bf16.xpose.msra.mxu0 0
    %723 = vmatprep.subr.bf16.mxu0 0
    %724 = vmatpush1.bf16.xpose.msra.mxu0 0
    %725 = vmatprep.mubr.bf16.mxu0 0
    %726 = vmatmul.mubr.bf16.gmra.mrb[0].mxu0 %v688
    %v727 = vpop.f32.mrb[0].mxu0
    %v728 = vadd.f32 0.0, %v727
    %v729 = vpop.f32.mrb[0].mxu0
    %v730 = vpop.f32.mrb[0].mxu0
    %v731 = vpop.f32.mrb[0].mxu0
    %732 = vdwg.mxu0
    %v733 = vmul.f32 %v682, 0.35355338
    %v734 = vmul.f32 %v728, 0.35355338
    %v735 = vsel %vm61, %v733, -1000000.0
    %v736 = vsel %vm65, %v734, -1000000.0
    %v737 = vsel %vm247, %v735, -inf
    %738 = vmax.xlane.f32.xlu0 %v737
    %v739 = vpop.xlane.xlu0 %738
    %v740 = vsel %vm247, %v736, -inf
    %741 = vmax.xlane.f32.xlu0 %v740
    %v742 = vpop.xlane.xlu0 %741
    %v743 = vsub.f32 %v735, %v739
    %v744 = vsub.f32 %v736, %v742
    %v745 = vmul.f32 %v743, 1.442695
    %v746 = vpow.pop %v745
    %v747 = vmul.f32 %v744, 1.442695
    %v748 = vpow.pop %v747
    %v749 = vsel %vm247, %v746, 0.0
    %750 = vadd.xlane.f32.xlu0 %v749
    %v751 = vpop.xlane.xlu0 %750
    %v752 = vsel %vm247, %v748, 0.0
    %753 = vadd.xlane.f32.xlu0 %v752
    %v754 = vpop.xlane.xlu0 %753
    %v755 = vrcp.pop %v751
    %v756 = vrcp.pop %v754
    %v757 = vmul.f32 %v746, %v755
    %v758 = vmul.f32 %v748, %v756
    %v759 = vpack.c.bf16 %v757, %v757
    %v760 = vpack.c.bf16 %v758, %v758
    %v762 = vsel %vm247, %v759, 0
    %v765 = vsel %vm371, %v639, 0
    %767 = vmatprep.subr.bf16.mxu0 0
    %768 = vmatpush1.bf16.msra.mxu0 %v765
    %769 = vmatprep.subr.bf16.mxu0 0
    %770 = vmatpush1.bf16.msra.mxu0 0
    %771 = vmatprep.subr.bf16.mxu0 0
    %772 = vmatpush1.bf16.msra.mxu0 0
    %773 = vmatprep.subr.bf16.mxu0 0
    %774 = vmatpush1.bf16.msra.mxu0 0
    %775 = vmatprep.subr.bf16.mxu0 0
    %776 = vmatpush1.bf16.msra.mxu0 0
    %777 = vmatprep.subr.bf16.mxu0 0
    %778 = vmatpush1.bf16.msra.mxu0 0
    %779 = vmatprep.subr.bf16.mxu0 0
    %780 = vmatpush1.bf16.msra.mxu0 0
    %781 = vmatprep.subr.bf16.mxu0 0
    %782 = vmatpush1.bf16.msra.mxu0 0
    %783 = vmatprep.subr.bf16.mxu0 0
    %784 = vmatpush1.bf16.msra.mxu0 0
    %785 = vmatprep.subr.bf16.mxu0 0
    %786 = vmatpush1.bf16.msra.mxu0 0
    %787 = vmatprep.subr.bf16.mxu0 0
    %788 = vmatpush1.bf16.msra.mxu0 0
    %789 = vmatprep.subr.bf16.mxu0 0
    %790 = vmatpush1.bf16.msra.mxu0 0
    %791 = vmatprep.subr.bf16.mxu0 0
    %792 = vmatpush1.bf16.msra.mxu0 0
    %793 = vmatprep.subr.bf16.mxu0 0
    %794 = vmatpush1.bf16.msra.mxu0 0
    %795 = vmatprep.subr.bf16.mxu0 0
    %796 = vmatpush1.bf16.msra.mxu0 0
    %797 = vmatprep.subr.bf16.mxu0 0
    %798 = vmatpush1.bf16.msra.mxu0 0
    %799 = vmatprep.mubr.bf16.mxu0 0
    %800 = vmatmul.mubr.bf16.gmra.mrb[0].mxu0 %v762
    %v801 = vpop.f32.mrb[0].mxu0
    %v802 = vadd.f32 0.0, %v801
    %v803 = vpop.f32.mrb[0].mxu0
    %v804 = vpop.f32.mrb[0].mxu0
    %v805 = vpop.f32.mrb[0].mxu0
    %806 = vdwg.mxu0
    %v808 = vsel %vm247, %v760, 0
    %v811 = vsel %vm371, %v640, 0
    %813 = vmatprep.subr.bf16.mxu0 0
    %814 = vmatpush1.bf16.msra.mxu0 %v811
    %815 = vmatprep.subr.bf16.mxu0 0
    %816 = vmatpush1.bf16.msra.mxu0 0
    %817 = vmatprep.subr.bf16.mxu0 0
    %818 = vmatpush1.bf16.msra.mxu0 0
    %819 = vmatprep.subr.bf16.mxu0 0
    %820 = vmatpush1.bf16.msra.mxu0 0
    %821 = vmatprep.subr.bf16.mxu0 0
    %822 = vmatpush1.bf16.msra.mxu0 0
    %823 = vmatprep.subr.bf16.mxu0 0
    %824 = vmatpush1.bf16.msra.mxu0 0
    %825 = vmatprep.subr.bf16.mxu0 0
    %826 = vmatpush1.bf16.msra.mxu0 0
    %827 = vmatprep.subr.bf16.mxu0 0
    %828 = vmatpush1.bf16.msra.mxu0 0
    %829 = vmatprep.subr.bf16.mxu0 0
    %830 = vmatpush1.bf16.msra.mxu0 0
    %831 = vmatprep.subr.bf16.mxu0 0
    %832 = vmatpush1.bf16.msra.mxu0 0
    %833 = vmatprep.subr.bf16.mxu0 0
    %834 = vmatpush1.bf16.msra.mxu0 0
    %835 = vmatprep.subr.bf16.mxu0 0
    %836 = vmatpush1.bf16.msra.mxu0 0
    %837 = vmatprep.subr.bf16.mxu0 0
    %838 = vmatpush1.bf16.msra.mxu0 0
    %839 = vmatprep.subr.bf16.mxu0 0
    %840 = vmatpush1.bf16.msra.mxu0 0
    %841 = vmatprep.subr.bf16.mxu0 0
    %842 = vmatpush1.bf16.msra.mxu0 0
    %843 = vmatprep.subr.bf16.mxu0 0
    %844 = vmatpush1.bf16.msra.mxu0 0
    %845 = vmatprep.mubr.bf16.mxu0 0
    %846 = vmatmul.mubr.bf16.gmra.mrb[0].mxu0 %v808
    %v847 = vpop.f32.mrb[0].mxu0
    %v848 = vadd.f32 0.0, %v847
    %v849 = vpop.f32.mrb[0].mxu0
    %v850 = vpop.f32.mrb[0].mxu0
    %v851 = vpop.f32.mrb[0].mxu0
    %852 = vdwg.mxu0
    %s853 = scalar_lea.vmem %s2, 32
    %v854 = vld [vmem:[%s853] sm:$0xf]
    %v855 = vld [vmem:[%s853 + $0x4] sm:$0xf]
    %v856 = vld [vmem:[%s853 + $0x8] sm:$0xf]
    %v857 = vld [vmem:[%s853 + $0xc] sm:$0xf]
    %v862 = vunpack.c.l.b16 %v854
    %v863 = vunpack.c.l.b16 %v855
    %v864 = vunpack.c.l.b16 %v856
    %v865 = vunpack.c.l.b16 %v857
    %v866 = vpack.c.b16 %v863, %v862
    %v867 = vpack.c.b16 %v865, %v864
    %870 = vmatprep.subr.bf16.mxu0 0
    %871 = vmatpush1.bf16.msra.mxu0 %v866
    %872 = vmatprep.subr.bf16.mxu0 0
    %873 = vmatpush1.bf16.msra.mxu0 %v867
    %874 = vmatprep.subr.bf16.mxu0 0
    %875 = vmatpush1.bf16.msra.mxu0 0
    %876 = vmatprep.subr.bf16.mxu0 0
    %877 = vmatpush1.bf16.msra.mxu0 0
    %878 = vmatprep.subr.bf16.mxu0 0
    %879 = vmatpush1.bf16.msra.mxu0 0
    %880 = vmatprep.subr.bf16.mxu0 0
    %881 = vmatpush1.bf16.msra.mxu0 0
    %882 = vmatprep.subr.bf16.mxu0 0
    %883 = vmatpush1.bf16.msra.mxu0 0
    %884 = vmatprep.subr.bf16.mxu0 0
    %885 = vmatpush1.bf16.msra.mxu0 0
    %886 = vmatprep.subr.bf16.mxu0 0
    %887 = vmatpush1.bf16.msra.mxu0 0
    %888 = vmatprep.subr.bf16.mxu0 0
    %889 = vmatpush1.bf16.msra.mxu0 0
    %890 = vmatprep.subr.bf16.mxu0 0
    %891 = vmatpush1.bf16.msra.mxu0 0
    %892 = vmatprep.subr.bf16.mxu0 0
    %893 = vmatpush1.bf16.msra.mxu0 0
    %894 = vmatprep.subr.bf16.mxu0 0
    %895 = vmatpush1.bf16.msra.mxu0 0
    %896 = vmatprep.subr.bf16.mxu0 0
    %897 = vmatpush1.bf16.msra.mxu0 0
    %898 = vmatprep.subr.bf16.mxu0 0
    %899 = vmatpush1.bf16.msra.mxu0 0
    %900 = vmatprep.subr.bf16.mxu0 0
    %901 = vmatpush1.bf16.msra.mxu0 0
    %902 = vmatprep.mubr.bf16.mxu0 0
    %903 = vmatmul.mubr.bf16.gmra.mrb[0].mxu0 %v84
    %v904 = vpop.f32.mrb[0].mxu0
    %v905 = vadd.f32 0.0, %v904
    %v906 = vpop.f32.mrb[0].mxu0
    %v907 = vpop.f32.mrb[0].mxu0
    %v908 = vadd.f32 0.0, %v907
    %v909 = vpop.f32.mrb[0].mxu0
    %910 = vdwg.mxu0
    %s911 = scalar_lea.vmem %s3, 32
    %v912 = vld [vmem:[%s911] sm:$0xf]
    %v913 = vld [vmem:[%s911 + $0x4] sm:$0xf]
    %v914 = vld [vmem:[%s911 + $0x8] sm:$0xf]
    %v915 = vld [vmem:[%s911 + $0xc] sm:$0xf]
    %v920 = vunpack.c.l.b16 %v912
    %v921 = vunpack.c.l.b16 %v913
    %v922 = vunpack.c.l.b16 %v914
    %v923 = vunpack.c.l.b16 %v915
    %v924 = vpack.c.b16 %v921, %v920
    %v925 = vpack.c.b16 %v923, %v922
    %928 = vmatprep.subr.bf16.mxu0 0
    %929 = vmatpush1.bf16.msra.mxu0 %v924
    %930 = vmatprep.subr.bf16.mxu0 0
    %931 = vmatpush1.bf16.msra.mxu0 %v925
    %932 = vmatprep.subr.bf16.mxu0 0
    %933 = vmatpush1.bf16.msra.mxu0 0
    %934 = vmatprep.subr.bf16.mxu0 0
    %935 = vmatpush1.bf16.msra.mxu0 0
    %936 = vmatprep.subr.bf16.mxu0 0
    %937 = vmatpush1.bf16.msra.mxu0 0
    %938 = vmatprep.subr.bf16.mxu0 0
    %939 = vmatpush1.bf16.msra.mxu0 0
    %940 = vmatprep.subr.bf16.mxu0 0
    %941 = vmatpush1.bf16.msra.mxu0 0
    %942 = vmatprep.subr.bf16.mxu0 0
    %943 = vmatpush1.bf16.msra.mxu0 0
    %944 = vmatprep.subr.bf16.mxu0 0
    %945 = vmatpush1.bf16.msra.mxu0 0
    %946 = vmatprep.subr.bf16.mxu0 0
    %947 = vmatpush1.bf16.msra.mxu0 0
    %948 = vmatprep.subr.bf16.mxu0 0
    %949 = vmatpush1.bf16.msra.mxu0 0
    %950 = vmatprep.subr.bf16.mxu0 0
    %951 = vmatpush1.bf16.msra.mxu0 0
    %952 = vmatprep.subr.bf16.mxu0 0
    %953 = vmatpush1.bf16.msra.mxu0 0
    %954 = vmatprep.subr.bf16.mxu0 0
    %955 = vmatpush1.bf16.msra.mxu0 0
    %956 = vmatprep.subr.bf16.mxu0 0
    %957 = vmatpush1.bf16.msra.mxu0 0
    %958 = vmatprep.subr.bf16.mxu0 0
    %959 = vmatpush1.bf16.msra.mxu0 0
    %960 = vmatprep.mubr.bf16.mxu0 0
    %961 = vmatmul.mubr.bf16.gmra.mrb[0].mxu0 %v84
    %v962 = vpop.f32.mrb[0].mxu0
    %v963 = vadd.f32 0.0, %v962
    %v964 = vpop.f32.mrb[0].mxu0
    %v965 = vpop.f32.mrb[0].mxu0
    %v966 = vadd.f32 0.0, %v965
    %v967 = vpop.f32.mrb[0].mxu0
    %968 = vdwg.mxu0
    %s969 = scalar_lea.vmem %s4, 32
    %v970 = vld [vmem:[%s969] sm:$0xf]
    %v971 = vld [vmem:[%s969 + $0x4] sm:$0xf]
    %v972 = vld [vmem:[%s969 + $0x8] sm:$0xf]
    %v973 = vld [vmem:[%s969 + $0xc] sm:$0xf]
    %v978 = vunpack.c.l.b16 %v970
    %v979 = vunpack.c.l.b16 %v971
    %v980 = vunpack.c.l.b16 %v972
    %v981 = vunpack.c.l.b16 %v973
    %v982 = vpack.c.b16 %v979, %v978
    %v983 = vpack.c.b16 %v981, %v980
    %986 = vmatprep.subr.bf16.mxu0 0
    %987 = vmatpush1.bf16.msra.mxu0 %v982
    %988 = vmatprep.subr.bf16.mxu0 0
    %989 = vmatpush1.bf16.msra.mxu0 %v983
    %990 = vmatprep.subr.bf16.mxu0 0
    %991 = vmatpush1.bf16.msra.mxu0 0
    %992 = vmatprep.subr.bf16.mxu0 0
    %993 = vmatpush1.bf16.msra.mxu0 0
    %994 = vmatprep.subr.bf16.mxu0 0
    %995 = vmatpush1.bf16.msra.mxu0 0
    %996 = vmatprep.subr.bf16.mxu0 0
    %997 = vmatpush1.bf16.msra.mxu0 0
    %998 = vmatprep.subr.bf16.mxu0 0
    %999 = vmatpush1.bf16.msra.mxu0 0
    %1000 = vmatprep.subr.bf16.mxu0 0
    %1001 = vmatpush1.bf16.msra.mxu0 0
    %1002 = vmatprep.subr.bf16.mxu0 0
    %1003 = vmatpush1.bf16.msra.mxu0 0
    %1004 = vmatprep.subr.bf16.mxu0 0
    %1005 = vmatpush1.bf16.msra.mxu0 0
    %1006 = vmatprep.subr.bf16.mxu0 0
    %1007 = vmatpush1.bf16.msra.mxu0 0
    %1008 = vmatprep.subr.bf16.mxu0 0
    %1009 = vmatpush1.bf16.msra.mxu0 0
    %1010 = vmatprep.subr.bf16.mxu0 0
    %1011 = vmatpush1.bf16.msra.mxu0 0
    %1012 = vmatprep.subr.bf16.mxu0 0
    %1013 = vmatpush1.bf16.msra.mxu0 0
    %1014 = vmatprep.subr.bf16.mxu0 0
    %1015 = vmatpush1.bf16.msra.mxu0 0
    %1016 = vmatprep.subr.bf16.mxu0 0
    %1017 = vmatpush1.bf16.msra.mxu0 0
    %1018 = vmatprep.mubr.bf16.mxu0 0
    %1019 = vmatmul.mubr.bf16.gmra.mrb[0].mxu0 %v84
    %v1020 = vpop.f32.mrb[0].mxu0
    %v1021 = vadd.f32 0.0, %v1020
    %v1022 = vpop.f32.mrb[0].mxu0
    %v1023 = vpop.f32.mrb[0].mxu0
    %v1024 = vadd.f32 0.0, %v1023
    %v1025 = vpop.f32.mrb[0].mxu0
    %1026 = vdwg.mxu0
    %v1027 = vpack.c.bf16 %v905, %v905
    %v1028 = vpack.c.bf16 %v908, %v908
    %v1029 = vpack.c.bf16 %v963, %v963
    %v1030 = vpack.c.bf16 %v966, %v966
    %v1031 = vpack.c.bf16 %v1021, %v1021
    %v1032 = vpack.c.bf16 %v1024, %v1024
    %v1034 = vsel %vm247, %v1027, 0
    %v1037 = vsel %vm247, %v1029, 0
    %1039 = vmatprep.subr.bf16.mxu0 0
    %1040 = vmatpush1.bf16.xpose.msra.mxu0 %v1037
    %1041 = vmatprep.subr.bf16.mxu0 0
    %1042 = vmatpush1.bf16.xpose.msra.mxu0 0
    %1043 = vmatprep.subr.bf16.mxu0 0
    %1044 = vmatpush1.bf16.xpose.msra.mxu0 0
    %1045 = vmatprep.subr.bf16.mxu0 0
    %1046 = vmatpush1.bf16.xpose.msra.mxu0 0
    %1047 = vmatprep.subr.bf16.mxu0 0
    %1048 = vmatpush1.bf16.xpose.msra.mxu0 0
    %1049 = vmatprep.subr.bf16.mxu0 0
    %1050 = vmatpush1.bf16.xpose.msra.mxu0 0
    %1051 = vmatprep.subr.bf16.mxu0 0
    %1052 = vmatpush1.bf16.xpose.msra.mxu0 0
    %1053 = vmatprep.subr.bf16.mxu0 0
    %1054 = vmatpush1.bf16.xpose.msra.mxu0 0
    %1055 = vmatprep.subr.bf16.mxu0 0
    %1056 = vmatpush1.bf16.xpose.msra.mxu0 0
    %1057 = vmatprep.subr.bf16.mxu0 0
    %1058 = vmatpush1.bf16.xpose.msra.mxu0 0
    %1059 = vmatprep.subr.bf16.mxu0 0
    %1060 = vmatpush1.bf16.xpose.msra.mxu0 0
    %1061 = vmatprep.subr.bf16.mxu0 0
    %1062 = vmatpush1.bf16.xpose.msra.mxu0 0
    %1063 = vmatprep.subr.bf16.mxu0 0
    %1064 = vmatpush1.bf16.xpose.msra.mxu0 0
    %1065 = vmatprep.subr.bf16.mxu0 0
    %1066 = vmatpush1.bf16.xpose.msra.mxu0 0
    %1067 = vmatprep.subr.bf16.mxu0 0
    %1068 = vmatpush1.bf16.xpose.msra.mxu0 0
    %1069 = vmatprep.subr.bf16.mxu0 0
    %1070 = vmatpush1.bf16.xpose.msra.mxu0 0
    %1071 = vmatprep.mubr.bf16.mxu0 0
    %1072 = vmatmul.mubr.bf16.gmra.mrb[0].mxu0 %v1034
    %v1073 = vpop.f32.mrb[0].mxu0
    %v1074 = vadd.f32 0.0, %v1073
    %v1075 = vpop.f32.mrb[0].mxu0
    %v1076 = vpop.f32.mrb[0].mxu0
    %v1077 = vpop.f32.mrb[0].mxu0
    %1078 = vdwg.mxu0
    %v1080 = vsel %vm247, %v1028, 0
    %v1083 = vsel %vm247, %v1030, 0
    %1085 = vmatprep.subr.bf16.mxu0 0
    %1086 = vmatpush1.bf16.xpose.msra.mxu0 %v1083
    %1087 = vmatprep.subr.bf16.mxu0 0
    %1088 = vmatpush1.bf16.xpose.msra.mxu0 0
    %1089 = vmatprep.subr.bf16.mxu0 0
    %1090 = vmatpush1.bf16.xpose.msra.mxu0 0
    %1091 = vmatprep.subr.bf16.mxu0 0
    %1092 = vmatpush1.bf16.xpose.msra.mxu0 0
    %1093 = vmatprep.subr.bf16.mxu0 0
    %1094 = vmatpush1.bf16.xpose.msra.mxu0 0
    %1095 = vmatprep.subr.bf16.mxu0 0
    %1096 = vmatpush1.bf16.xpose.msra.mxu0 0
    %1097 = vmatprep.subr.bf16.mxu0 0
    %1098 = vmatpush1.bf16.xpose.msra.mxu0 0
    %1099 = vmatprep.subr.bf16.mxu0 0
    %1100 = vmatpush1.bf16.xpose.msra.mxu0 0
    %1101 = vmatprep.subr.bf16.mxu0 0
    %1102 = vmatpush1.bf16.xpose.msra.mxu0 0
    %1103 = vmatprep.subr.bf16.mxu0 0
    %1104 = vmatpush1.bf16.xpose.msra.mxu0 0
    %1105 = vmatprep.subr.bf16.mxu0 0
    %1106 = vmatpush1.bf16.xpose.msra.mxu0 0
    %1107 = vmatprep.subr.bf16.mxu0 0
    %1108 = vmatpush1.bf16.xpose.msra.mxu0 0
    %1109 = vmatprep.subr.bf16.mxu0 0
    %1110 = vmatpush1.bf16.xpose.msra.mxu0 0
    %1111 = vmatprep.subr.bf16.mxu0 0
    %1112 = vmatpush1.bf16.xpose.msra.mxu0 0
    %1113 = vmatprep.subr.bf16.mxu0 0
    %1114 = vmatpush1.bf16.xpose.msra.mxu0 0
    %1115 = vmatprep.subr.bf16.mxu0 0
    %1116 = vmatpush1.bf16.xpose.msra.mxu0 0
    %1117 = vmatprep.mubr.bf16.mxu0 0
    %1118 = vmatmul.mubr.bf16.gmra.mrb[0].mxu0 %v1080
    %v1119 = vpop.f32.mrb[0].mxu0
    %v1120 = vadd.f32 0.0, %v1119
    %v1121 = vpop.f32.mrb[0].mxu0
    %v1122 = vpop.f32.mrb[0].mxu0
    %v1123 = vpop.f32.mrb[0].mxu0
    %1124 = vdwg.mxu0
    %v1125 = vmul.f32 %v1074, 0.35355338
    %v1126 = vmul.f32 %v1120, 0.35355338
    %v1127 = vsel %vm61, %v1125, -1000000.0
    %v1128 = vsel %vm65, %v1126, -1000000.0
    %v1129 = vsel %vm247, %v1127, -inf
    %1130 = vmax.xlane.f32.xlu0 %v1129
    %v1131 = vpop.xlane.xlu0 %1130
    %v1132 = vsel %vm247, %v1128, -inf
    %1133 = vmax.xlane.f32.xlu0 %v1132
    %v1134 = vpop.xlane.xlu0 %1133
    %v1135 = vsub.f32 %v1127, %v1131
    %v1136 = vsub.f32 %v1128, %v1134
    %v1137 = vmul.f32 %v1135, 1.442695
    %v1138 = vpow.pop %v1137
    %v1139 = vmul.f32 %v1136, 1.442695
    %v1140 = vpow.pop %v1139
    %v1141 = vsel %vm247, %v1138, 0.0
    %1142 = vadd.xlane.f32.xlu0 %v1141
    %v1143 = vpop.xlane.xlu0 %1142
    %v1144 = vsel %vm247, %v1140, 0.0
    %1145 = vadd.xlane.f32.xlu0 %v1144
    %v1146 = vpop.xlane.xlu0 %1145
    %v1147 = vrcp.pop %v1143
    %v1148 = vrcp.pop %v1146
    %v1149 = vmul.f32 %v1138, %v1147
    %v1150 = vmul.f32 %v1140, %v1148
    %v1151 = vpack.c.bf16 %v1149, %v1149
    %v1152 = vpack.c.bf16 %v1150, %v1150
    %v1154 = vsel %vm247, %v1151, 0
    %v1157 = vsel %vm371, %v1031, 0
    %1159 = vmatprep.subr.bf16.mxu0 0
    %1160 = vmatpush1.bf16.msra.mxu0 %v1157
    %1161 = vmatprep.subr.bf16.mxu0 0
    %1162 = vmatpush1.bf16.msra.mxu0 0
    %1163 = vmatprep.subr.bf16.mxu0 0
    %1164 = vmatpush1.bf16.msra.mxu0 0
    %1165 = vmatprep.subr.bf16.mxu0 0
    %1166 = vmatpush1.bf16.msra.mxu0 0
    %1167 = vmatprep.subr.bf16.mxu0 0
    %1168 = vmatpush1.bf16.msra.mxu0 0
    %1169 = vmatprep.subr.bf16.mxu0 0
    %1170 = vmatpush1.bf16.msra.mxu0 0
    %1171 = vmatprep.subr.bf16.mxu0 0
    %1172 = vmatpush1.bf16.msra.mxu0 0
    %1173 = vmatprep.subr.bf16.mxu0 0
    %1174 = vmatpush1.bf16.msra.mxu0 0
    %1175 = vmatprep.subr.bf16.mxu0 0
    %1176 = vmatpush1.bf16.msra.mxu0 0
    %1177 = vmatprep.subr.bf16.mxu0 0
    %1178 = vmatpush1.bf16.msra.mxu0 0
    %1179 = vmatprep.subr.bf16.mxu0 0
    %1180 = vmatpush1.bf16.msra.mxu0 0
    %1181 = vmatprep.subr.bf16.mxu0 0
    %1182 = vmatpush1.bf16.msra.mxu0 0
    %1183 = vmatprep.subr.bf16.mxu0 0
    %1184 = vmatpush1.bf16.msra.mxu0 0
    %1185 = vmatprep.subr.bf16.mxu0 0
    %1186 = vmatpush1.bf16.msra.mxu0 0
    %1187 = vmatprep.subr.bf16.mxu0 0
    %1188 = vmatpush1.bf16.msra.mxu0 0
    %1189 = vmatprep.subr.bf16.mxu0 0
    %1190 = vmatpush1.bf16.msra.mxu0 0
    %1191 = vmatprep.mubr.bf16.mxu0 0
    %1192 = vmatmul.mubr.bf16.gmra.mrb[0].mxu0 %v1154
    %v1193 = vpop.f32.mrb[0].mxu0
    %v1194 = vadd.f32 0.0, %v1193
    %v1195 = vpop.f32.mrb[0].mxu0
    %v1196 = vpop.f32.mrb[0].mxu0
    %v1197 = vpop.f32.mrb[0].mxu0
    %1198 = vdwg.mxu0
    %v1200 = vsel %vm247, %v1152, 0
    %v1203 = vsel %vm371, %v1032, 0
    %1205 = vmatprep.subr.bf16.mxu0 0
    %1206 = vmatpush1.bf16.msra.mxu0 %v1203
    %1207 = vmatprep.subr.bf16.mxu0 0
    %1208 = vmatpush1.bf16.msra.mxu0 0
    %1209 = vmatprep.subr.bf16.mxu0 0
    %1210 = vmatpush1.bf16.msra.mxu0 0
    %1211 = vmatprep.subr.bf16.mxu0 0
    %1212 = vmatpush1.bf16.msra.mxu0 0
    %1213 = vmatprep.subr.bf16.mxu0 0
    %1214 = vmatpush1.bf16.msra.mxu0 0
    %1215 = vmatprep.subr.bf16.mxu0 0
    %1216 = vmatpush1.bf16.msra.mxu0 0
    %1217 = vmatprep.subr.bf16.mxu0 0
    %1218 = vmatpush1.bf16.msra.mxu0 0
    %1219 = vmatprep.subr.bf16.mxu0 0
    %1220 = vmatpush1.bf16.msra.mxu0 0
    %1221 = vmatprep.subr.bf16.mxu0 0
    %1222 = vmatpush1.bf16.msra.mxu0 0
    %1223 = vmatprep.subr.bf16.mxu0 0
    %1224 = vmatpush1.bf16.msra.mxu0 0
    %1225 = vmatprep.subr.bf16.mxu0 0
    %1226 = vmatpush1.bf16.msra.mxu0 0
    %1227 = vmatprep.subr.bf16.mxu0 0
    %1228 = vmatpush1.bf16.msra.mxu0 0
    %1229 = vmatprep.subr.bf16.mxu0 0
    %1230 = vmatpush1.bf16.msra.mxu0 0
    %1231 = vmatprep.subr.bf16.mxu0 0
    %1232 = vmatpush1.bf16.msra.mxu0 0
    %1233 = vmatprep.subr.bf16.mxu0 0
    %1234 = vmatpush1.bf16.msra.mxu0 0
    %1235 = vmatprep.subr.bf16.mxu0 0
    %1236 = vmatpush1.bf16.msra.mxu0 0
    %1237 = vmatprep.mubr.bf16.mxu0 0
    %1238 = vmatmul.mubr.bf16.gmra.mrb[0].mxu0 %v1200
    %v1239 = vpop.f32.mrb[0].mxu0
    %v1240 = vadd.f32 0.0, %v1239
    %v1241 = vpop.f32.mrb[0].mxu0
    %v1242 = vpop.f32.mrb[0].mxu0
    %v1243 = vpop.f32.mrb[0].mxu0
    %1244 = vdwg.mxu0
    %s1245 = scalar_lea.vmem %s2, 48
    %v1246 = vld [vmem:[%s1245] sm:$0xf]
    %v1247 = vld [vmem:[%s1245 + $0x4] sm:$0xf]
    %v1248 = vld [vmem:[%s1245 + $0x8] sm:$0xf]
    %v1249 = vld [vmem:[%s1245 + $0xc] sm:$0xf]
    %v1254 = vunpack.c.l.b16 %v1246
    %v1255 = vunpack.c.l.b16 %v1247
    %v1256 = vunpack.c.l.b16 %v1248
    %v1257 = vunpack.c.l.b16 %v1249
    %v1258 = vpack.c.b16 %v1255, %v1254
    %v1259 = vpack.c.b16 %v1257, %v1256
    %1262 = vmatprep.subr.bf16.mxu0 0
    %1263 = vmatpush1.bf16.msra.mxu0 %v1258
    %1264 = vmatprep.subr.bf16.mxu0 0
    %1265 = vmatpush1.bf16.msra.mxu0 %v1259
    %1266 = vmatprep.subr.bf16.mxu0 0
    %1267 = vmatpush1.bf16.msra.mxu0 0
    %1268 = vmatprep.subr.bf16.mxu0 0
    %1269 = vmatpush1.bf16.msra.mxu0 0
    %1270 = vmatprep.subr.bf16.mxu0 0
    %1271 = vmatpush1.bf16.msra.mxu0 0
    %1272 = vmatprep.subr.bf16.mxu0 0
    %1273 = vmatpush1.bf16.msra.mxu0 0
    %1274 = vmatprep.subr.bf16.mxu0 0
    %1275 = vmatpush1.bf16.msra.mxu0 0
    %1276 = vmatprep.subr.bf16.mxu0 0
    %1277 = vmatpush1.bf16.msra.mxu0 0
    %1278 = vmatprep.subr.bf16.mxu0 0
    %1279 = vmatpush1.bf16.msra.mxu0 0
    %1280 = vmatprep.subr.bf16.mxu0 0
    %1281 = vmatpush1.bf16.msra.mxu0 0
    %1282 = vmatprep.subr.bf16.mxu0 0
    %1283 = vmatpush1.bf16.msra.mxu0 0
    %1284 = vmatprep.subr.bf16.mxu0 0
    %1285 = vmatpush1.bf16.msra.mxu0 0
    %1286 = vmatprep.subr.bf16.mxu0 0
    %1287 = vmatpush1.bf16.msra.mxu0 0
    %1288 = vmatprep.subr.bf16.mxu0 0
    %1289 = vmatpush1.bf16.msra.mxu0 0
    %1290 = vmatprep.subr.bf16.mxu0 0
    %1291 = vmatpush1.bf16.msra.mxu0 0
    %1292 = vmatprep.subr.bf16.mxu0 0
    %1293 = vmatpush1.bf16.msra.mxu0 0
    %1294 = vmatprep.mubr.bf16.mxu0 0
    %1295 = vmatmul.mubr.bf16.gmra.mrb[0].mxu0 %v84
    %v1296 = vpop.f32.mrb[0].mxu0
    %v1297 = vadd.f32 0.0, %v1296
    %v1298 = vpop.f32.mrb[0].mxu0
    %v1299 = vpop.f32.mrb[0].mxu0
    %v1300 = vadd.f32 0.0, %v1299
    %v1301 = vpop.f32.mrb[0].mxu0
    %1302 = vdwg.mxu0
    %s1303 = scalar_lea.vmem %s3, 48
    %v1304 = vld [vmem:[%s1303] sm:$0xf]
    %v1305 = vld [vmem:[%s1303 + $0x4] sm:$0xf]
    %v1306 = vld [vmem:[%s1303 + $0x8] sm:$0xf]
    %v1307 = vld [vmem:[%s1303 + $0xc] sm:$0xf]
    %v1312 = vunpack.c.l.b16 %v1304
    %v1313 = vunpack.c.l.b16 %v1305
    %v1314 = vunpack.c.l.b16 %v1306
    %v1315 = vunpack.c.l.b16 %v1307
    %v1316 = vpack.c.b16 %v1313, %v1312
    %v1317 = vpack.c.b16 %v1315, %v1314
    %1320 = vmatprep.subr.bf16.mxu0 0
    %1321 = vmatpush1.bf16.msra.mxu0 %v1316
    %1322 = vmatprep.subr.bf16.mxu0 0
    %1323 = vmatpush1.bf16.msra.mxu0 %v1317
    %1324 = vmatprep.subr.bf16.mxu0 0
    %1325 = vmatpush1.bf16.msra.mxu0 0
    %1326 = vmatprep.subr.bf16.mxu0 0
    %1327 = vmatpush1.bf16.msra.mxu0 0
    %1328 = vmatprep.subr.bf16.mxu0 0
    %1329 = vmatpush1.bf16.msra.mxu0 0
    %1330 = vmatprep.subr.bf16.mxu0 0
    %1331 = vmatpush1.bf16.msra.mxu0 0
    %1332 = vmatprep.subr.bf16.mxu0 0
    %1333 = vmatpush1.bf16.msra.mxu0 0
    %1334 = vmatprep.subr.bf16.mxu0 0
    %1335 = vmatpush1.bf16.msra.mxu0 0
    %1336 = vmatprep.subr.bf16.mxu0 0
    %1337 = vmatpush1.bf16.msra.mxu0 0
    %1338 = vmatprep.subr.bf16.mxu0 0
    %1339 = vmatpush1.bf16.msra.mxu0 0
    %1340 = vmatprep.subr.bf16.mxu0 0
    %1341 = vmatpush1.bf16.msra.mxu0 0
    %1342 = vmatprep.subr.bf16.mxu0 0
    %1343 = vmatpush1.bf16.msra.mxu0 0
    %1344 = vmatprep.subr.bf16.mxu0 0
    %1345 = vmatpush1.bf16.msra.mxu0 0
    %1346 = vmatprep.subr.bf16.mxu0 0
    %1347 = vmatpush1.bf16.msra.mxu0 0
    %1348 = vmatprep.subr.bf16.mxu0 0
    %1349 = vmatpush1.bf16.msra.mxu0 0
    %1350 = vmatprep.subr.bf16.mxu0 0
    %1351 = vmatpush1.bf16.msra.mxu0 0
    %1352 = vmatprep.mubr.bf16.mxu0 0
    %1353 = vmatmul.mubr.bf16.gmra.mrb[0].mxu0 %v84
    %v1354 = vpop.f32.mrb[0].mxu0
    %v1355 = vadd.f32 0.0, %v1354
    %v1356 = vpop.f32.mrb[0].mxu0
    %v1357 = vpop.f32.mrb[0].mxu0
    %v1358 = vadd.f32 0.0, %v1357
    %v1359 = vpop.f32.mrb[0].mxu0
    %1360 = vdwg.mxu0
    %s1361 = scalar_lea.vmem %s4, 48
    %v1362 = vld [vmem:[%s1361] sm:$0xf]
    %v1363 = vld [vmem:[%s1361 + $0x4] sm:$0xf]
    %v1364 = vld [vmem:[%s1361 + $0x8] sm:$0xf]
    %v1365 = vld [vmem:[%s1361 + $0xc] sm:$0xf]
    %v1370 = vunpack.c.l.b16 %v1362
    %v1371 = vunpack.c.l.b16 %v1363
    %v1372 = vunpack.c.l.b16 %v1364
    %v1373 = vunpack.c.l.b16 %v1365
    %v1374 = vpack.c.b16 %v1371, %v1370
    %v1375 = vpack.c.b16 %v1373, %v1372
    %1378 = vmatprep.subr.bf16.mxu0 0
    %1379 = vmatpush1.bf16.msra.mxu0 %v1374
    %1380 = vmatprep.subr.bf16.mxu0 0
    %1381 = vmatpush1.bf16.msra.mxu0 %v1375
    %1382 = vmatprep.subr.bf16.mxu0 0
    %1383 = vmatpush1.bf16.msra.mxu0 0
    %1384 = vmatprep.subr.bf16.mxu0 0
    %1385 = vmatpush1.bf16.msra.mxu0 0
    %1386 = vmatprep.subr.bf16.mxu0 0
    %1387 = vmatpush1.bf16.msra.mxu0 0
    %1388 = vmatprep.subr.bf16.mxu0 0
    %1389 = vmatpush1.bf16.msra.mxu0 0
    %1390 = vmatprep.subr.bf16.mxu0 0
    %1391 = vmatpush1.bf16.msra.mxu0 0
    %1392 = vmatprep.subr.bf16.mxu0 0
    %1393 = vmatpush1.bf16.msra.mxu0 0
    %1394 = vmatprep.subr.bf16.mxu0 0
    %1395 = vmatpush1.bf16.msra.mxu0 0
    %1396 = vmatprep.subr.bf16.mxu0 0
    %1397 = vmatpush1.bf16.msra.mxu0 0
    %1398 = vmatprep.subr.bf16.mxu0 0
    %1399 = vmatpush1.bf16.msra.mxu0 0
    %1400 = vmatprep.subr.bf16.mxu0 0
    %1401 = vmatpush1.bf16.msra.mxu0 0
    %1402 = vmatprep.subr.bf16.mxu0 0
    %1403 = vmatpush1.bf16.msra.mxu0 0
    %1404 = vmatprep.subr.bf16.mxu0 0
    %1405 = vmatpush1.bf16.msra.mxu0 0
    %1406 = vmatprep.subr.bf16.mxu0 0
    %1407 = vmatpush1.bf16.msra.mxu0 0
    %1408 = vmatprep.subr.bf16.mxu0 0
    %1409 = vmatpush1.bf16.msra.mxu0 0
    %1410 = vmatprep.mubr.bf16.mxu0 0
    %1411 = vmatmul.mubr.bf16.gmra.mrb[0].mxu0 %v84
    %v1412 = vpop.f32.mrb[0].mxu0
    %v1413 = vadd.f32 0.0, %v1412
    %v1414 = vpop.f32.mrb[0].mxu0
    %v1415 = vpop.f32.mrb[0].mxu0
    %v1416 = vadd.f32 0.0, %v1415
    %v1417 = vpop.f32.mrb[0].mxu0
    %1418 = vdwg.mxu0
    %v1419 = vpack.c.bf16 %v1297, %v1297
    %v1420 = vpack.c.bf16 %v1300, %v1300
    %v1421 = vpack.c.bf16 %v1355, %v1355
    %v1422 = vpack.c.bf16 %v1358, %v1358
    %v1423 = vpack.c.bf16 %v1413, %v1413
    %v1424 = vpack.c.bf16 %v1416, %v1416
    %v1426 = vsel %vm247, %v1419, 0
    %v1429 = vsel %vm247, %v1421, 0
    %1431 = vmatprep.subr.bf16.mxu0 0
    %1432 = vmatpush1.bf16.xpose.msra.mxu0 %v1429
    %1433 = vmatprep.subr.bf16.mxu0 0
    %1434 = vmatpush1.bf16.xpose.msra.mxu0 0
    %1435 = vmatprep.subr.bf16.mxu0 0
    %1436 = vmatpush1.bf16.xpose.msra.mxu0 0
    %1437 = vmatprep.subr.bf16.mxu0 0
    %1438 = vmatpush1.bf16.xpose.msra.mxu0 0
    %1439 = vmatprep.subr.bf16.mxu0 0
    %1440 = vmatpush1.bf16.xpose.msra.mxu0 0
    %1441 = vmatprep.subr.bf16.mxu0 0
    %1442 = vmatpush1.bf16.xpose.msra.mxu0 0
    %1443 = vmatprep.subr.bf16.mxu0 0
    %1444 = vmatpush1.bf16.xpose.msra.mxu0 0
    %1445 = vmatprep.subr.bf16.mxu0 0
    %1446 = vmatpush1.bf16.xpose.msra.mxu0 0
    %1447 = vmatprep.subr.bf16.mxu0 0
    %1448 = vmatpush1.bf16.xpose.msra.mxu0 0
    %1449 = vmatprep.subr.bf16.mxu0 0
    %1450 = vmatpush1.bf16.xpose.msra.mxu0 0
    %1451 = vmatprep.subr.bf16.mxu0 0
    %1452 = vmatpush1.bf16.xpose.msra.mxu0 0
    %1453 = vmatprep.subr.bf16.mxu0 0
    %1454 = vmatpush1.bf16.xpose.msra.mxu0 0
    %1455 = vmatprep.subr.bf16.mxu0 0
    %1456 = vmatpush1.bf16.xpose.msra.mxu0 0
    %1457 = vmatprep.subr.bf16.mxu0 0
    %1458 = vmatpush1.bf16.xpose.msra.mxu0 0
    %1459 = vmatprep.subr.bf16.mxu0 0
    %1460 = vmatpush1.bf16.xpose.msra.mxu0 0
    %1461 = vmatprep.subr.bf16.mxu0 0
    %1462 = vmatpush1.bf16.xpose.msra.mxu0 0
    %1463 = vmatprep.mubr.bf16.mxu0 0
    %1464 = vmatmul.mubr.bf16.gmra.mrb[0].mxu0 %v1426
    %v1465 = vpop.f32.mrb[0].mxu0
    %v1466 = vadd.f32 0.0, %v1465
    %v1467 = vpop.f32.mrb[0].mxu0
    %v1468 = vpop.f32.mrb[0].mxu0
    %v1469 = vpop.f32.mrb[0].mxu0
    %1470 = vdwg.mxu0
    %v1472 = vsel %vm247, %v1420, 0
    %v1475 = vsel %vm247, %v1422, 0
    %1477 = vmatprep.subr.bf16.mxu0 0
    %1478 = vmatpush1.bf16.xpose.msra.mxu0 %v1475
    %1479 = vmatprep.subr.bf16.mxu0 0
    %1480 = vmatpush1.bf16.xpose.msra.mxu0 0
    %1481 = vmatprep.subr.bf16.mxu0 0
    %1482 = vmatpush1.bf16.xpose.msra.mxu0 0
    %1483 = vmatprep.subr.bf16.mxu0 0
    %1484 = vmatpush1.bf16.xpose.msra.mxu0 0
    %1485 = vmatprep.subr.bf16.mxu0 0
    %1486 = vmatpush1.bf16.xpose.msra.mxu0 0
    %1487 = vmatprep.subr.bf16.mxu0 0
    %1488 = vmatpush1.bf16.xpose.msra.mxu0 0
    %1489 = vmatprep.subr.bf16.mxu0 0
    %1490 = vmatpush1.bf16.xpose.msra.mxu0 0
    %1491 = vmatprep.subr.bf16.mxu0 0
    %1492 = vmatpush1.bf16.xpose.msra.mxu0 0
    %1493 = vmatprep.subr.bf16.mxu0 0
    %1494 = vmatpush1.bf16.xpose.msra.mxu0 0
    %1495 = vmatprep.subr.bf16.mxu0 0
    %1496 = vmatpush1.bf16.xpose.msra.mxu0 0
    %1497 = vmatprep.subr.bf16.mxu0 0
    %1498 = vmatpush1.bf16.xpose.msra.mxu0 0
    %1499 = vmatprep.subr.bf16.mxu0 0
    %1500 = vmatpush1.bf16.xpose.msra.mxu0 0
    %1501 = vmatprep.subr.bf16.mxu0 0
    %1502 = vmatpush1.bf16.xpose.msra.mxu0 0
    %1503 = vmatprep.subr.bf16.mxu0 0
    %1504 = vmatpush1.bf16.xpose.msra.mxu0 0
    %1505 = vmatprep.subr.bf16.mxu0 0
    %1506 = vmatpush1.bf16.xpose.msra.mxu0 0
    %1507 = vmatprep.subr.bf16.mxu0 0
    %1508 = vmatpush1.bf16.xpose.msra.mxu0 0
    %1509 = vmatprep.mubr.bf16.mxu0 0
    %1510 = vmatmul.mubr.bf16.gmra.mrb[0].mxu0 %v1472
    %v1511 = vpop.f32.mrb[0].mxu0
    %v1512 = vadd.f32 0.0, %v1511
    %v1513 = vpop.f32.mrb[0].mxu0
    %v1514 = vpop.f32.mrb[0].mxu0
    %v1515 = vpop.f32.mrb[0].mxu0
    %1516 = vdwg.mxu0
    %v1517 = vmul.f32 %v1466, 0.35355338
    %v1518 = vmul.f32 %v1512, 0.35355338
    %v1519 = vsel %vm61, %v1517, -1000000.0
    %v1520 = vsel %vm65, %v1518, -1000000.0
    %v1521 = vsel %vm247, %v1519, -inf
    %1522 = vmax.xlane.f32.xlu0 %v1521
    %v1523 = vpop.xlane.xlu0 %1522
    %v1524 = vsel %vm247, %v1520, -inf
    %1525 = vmax.xlane.f32.xlu0 %v1524
    %v1526 = vpop.xlane.xlu0 %1525
    %v1527 = vsub.f32 %v1519, %v1523
    %v1528 = vsub.f32 %v1520, %v1526
    %v1529 = vmul.f32 %v1527, 1.442695
    %v1530 = vpow.pop %v1529
    %v1531 = vmul.f32 %v1528, 1.442695
    %v1532 = vpow.pop %v1531
    %v1533 = vsel %vm247, %v1530, 0.0
    %1534 = vadd.xlane.f32.xlu0 %v1533
    %v1535 = vpop.xlane.xlu0 %1534
    %v1536 = vsel %vm247, %v1532, 0.0
    %1537 = vadd.xlane.f32.xlu0 %v1536
    %v1538 = vpop.xlane.xlu0 %1537
    %v1539 = vrcp.pop %v1535
    %v1540 = vrcp.pop %v1538
    %v1541 = vmul.f32 %v1530, %v1539
    %v1542 = vmul.f32 %v1532, %v1540
    %v1543 = vpack.c.bf16 %v1541, %v1541
    %v1544 = vpack.c.bf16 %v1542, %v1542
    %v1546 = vsel %vm247, %v1543, 0
    %v1549 = vsel %vm371, %v1423, 0
    %1551 = vmatprep.subr.bf16.mxu0 0
    %1552 = vmatpush1.bf16.msra.mxu0 %v1549
    %1553 = vmatprep.subr.bf16.mxu0 0
    %1554 = vmatpush1.bf16.msra.mxu0 0
    %1555 = vmatprep.subr.bf16.mxu0 0
    %1556 = vmatpush1.bf16.msra.mxu0 0
    %1557 = vmatprep.subr.bf16.mxu0 0
    %1558 = vmatpush1.bf16.msra.mxu0 0
    %1559 = vmatprep.subr.bf16.mxu0 0
    %1560 = vmatpush1.bf16.msra.mxu0 0
    %1561 = vmatprep.subr.bf16.mxu0 0
    %1562 = vmatpush1.bf16.msra.mxu0 0
    %1563 = vmatprep.subr.bf16.mxu0 0
    %1564 = vmatpush1.bf16.msra.mxu0 0
    %1565 = vmatprep.subr.bf16.mxu0 0
    %1566 = vmatpush1.bf16.msra.mxu0 0
    %1567 = vmatprep.subr.bf16.mxu0 0
    %1568 = vmatpush1.bf16.msra.mxu0 0
    %1569 = vmatprep.subr.bf16.mxu0 0
    %1570 = vmatpush1.bf16.msra.mxu0 0
    %1571 = vmatprep.subr.bf16.mxu0 0
    %1572 = vmatpush1.bf16.msra.mxu0 0
    %1573 = vmatprep.subr.bf16.mxu0 0
    %1574 = vmatpush1.bf16.msra.mxu0 0
    %1575 = vmatprep.subr.bf16.mxu0 0
    %1576 = vmatpush1.bf16.msra.mxu0 0
    %1577 = vmatprep.subr.bf16.mxu0 0
    %1578 = vmatpush1.bf16.msra.mxu0 0
    %1579 = vmatprep.subr.bf16.mxu0 0
    %1580 = vmatpush1.bf16.msra.mxu0 0
    %1581 = vmatprep.subr.bf16.mxu0 0
    %1582 = vmatpush1.bf16.msra.mxu0 0
    %1583 = vmatprep.mubr.bf16.mxu0 0
    %1584 = vmatmul.mubr.bf16.gmra.mrb[0].mxu0 %v1546
    %v1585 = vpop.f32.mrb[0].mxu0
    %v1586 = vadd.f32 0.0, %v1585
    %v1587 = vpop.f32.mrb[0].mxu0
    %v1588 = vpop.f32.mrb[0].mxu0
    %v1589 = vpop.f32.mrb[0].mxu0
    %1590 = vdwg.mxu0
    %v1592 = vsel %vm247, %v1544, 0
    %v1595 = vsel %vm371, %v1424, 0
    %1597 = vmatprep.subr.bf16.mxu0 0
    %1598 = vmatpush1.bf16.msra.mxu0 %v1595
    %1599 = vmatprep.subr.bf16.mxu0 0
    %1600 = vmatpush1.bf16.msra.mxu0 0
    %1601 = vmatprep.subr.bf16.mxu0 0
    %1602 = vmatpush1.bf16.msra.mxu0 0
    %1603 = vmatprep.subr.bf16.mxu0 0
    %1604 = vmatpush1.bf16.msra.mxu0 0
    %1605 = vmatprep.subr.bf16.mxu0 0
    %1606 = vmatpush1.bf16.msra.mxu0 0
    %1607 = vmatprep.subr.bf16.mxu0 0
    %1608 = vmatpush1.bf16.msra.mxu0 0
    %1609 = vmatprep.subr.bf16.mxu0 0
    %1610 = vmatpush1.bf16.msra.mxu0 0
    %1611 = vmatprep.subr.bf16.mxu0 0
    %1612 = vmatpush1.bf16.msra.mxu0 0
    %1613 = vmatprep.subr.bf16.mxu0 0
    %1614 = vmatpush1.bf16.msra.mxu0 0
    %1615 = vmatprep.subr.bf16.mxu0 0
    %1616 = vmatpush1.bf16.msra.mxu0 0
    %1617 = vmatprep.subr.bf16.mxu0 0
    %1618 = vmatpush1.bf16.msra.mxu0 0
    %1619 = vmatprep.subr.bf16.mxu0 0
    %1620 = vmatpush1.bf16.msra.mxu0 0
    %1621 = vmatprep.subr.bf16.mxu0 0
    %1622 = vmatpush1.bf16.msra.mxu0 0
    %1623 = vmatprep.subr.bf16.mxu0 0
    %1624 = vmatpush1.bf16.msra.mxu0 0
    %1625 = vmatprep.subr.bf16.mxu0 0
    %1626 = vmatpush1.bf16.msra.mxu0 0
    %1627 = vmatprep.subr.bf16.mxu0 0
    %1628 = vmatpush1.bf16.msra.mxu0 0
    %1629 = vmatprep.mubr.bf16.mxu0 0
    %1630 = vmatmul.mubr.bf16.gmra.mrb[0].mxu0 %v1592
    %v1631 = vpop.f32.mrb[0].mxu0
    %v1632 = vadd.f32 0.0, %v1631
    %v1633 = vpop.f32.mrb[0].mxu0
    %v1634 = vpop.f32.mrb[0].mxu0
    %v1635 = vpop.f32.mrb[0].mxu0
    %1636 = vdwg.mxu0
    %1639 = vrot.lane.b32.xlu0 %v802, 8
    %v1640 = vpop.permute.xlu0 %1639
    %1641 = vrot.lane.b32.xlu0 %v848, 8
    %v1642 = vpop.permute.xlu0 %1641
    %1647 = vrot.lane.b32.xlu0 %v1194, 16
    %v1648 = vpop.permute.xlu0 %1647
    %1649 = vrot.lane.b32.xlu0 %v1240, 16
    %v1650 = vpop.permute.xlu0 %1649
    %1655 = vrot.lane.b32.xlu0 %v1586, 24
    %v1656 = vpop.permute.xlu0 %1655
    %1657 = vrot.lane.b32.xlu0 %v1632, 24
    %v1658 = vpop.permute.xlu0 %1657
    %v1661 = vsel %vm247, %v410, %v1640
    %v1662 = vsel %vm247, %v456, %v1642
    %vm1663 = vcmask 130048
    %v1664 = vsel %vm1663, %v1661, %v1648
    %v1665 = vsel %vm1663, %v1662, %v1650
    %vm1666 = vcmask 195584
    %v1667 = vsel %vm1666, %v1664, %v1656
    %v1668 = vsel %vm1666, %v1665, %v1658
    %v1669 = vpack.c.bf16 %v1668, %v1667
    %v1670 = vld [vmem:[%s5] sm:$0xf]
    %v1671 = vld [vmem:[%s5 + $0x4] sm:$0xf]
    %v1672 = vld [vmem:[%s5 + $0x8] sm:$0xf]
    %v1673 = vld [vmem:[%s5 + $0xc] sm:$0xf]
    %v1678 = vunpack.c.l.b16 %v1670
    %v1679 = vunpack.c.l.b16 %v1671
    %v1680 = vunpack.c.l.b16 %v1672
    %v1681 = vunpack.c.l.b16 %v1673
    %v1682 = vpack.c.b16 %v1679, %v1678
    %v1683 = vpack.c.b16 %v1681, %v1680
    %v1687 = vsel %vm82, %v1669, 0
    %1689 = vmatprep.subr.bf16.mxu0 0
    %1690 = vmatpush1.bf16.msra.mxu0 %v1682
    %1691 = vmatprep.subr.bf16.mxu0 0
    %1692 = vmatpush1.bf16.msra.mxu0 %v1683
    %1693 = vmatprep.subr.bf16.mxu0 0
    %1694 = vmatpush1.bf16.msra.mxu0 0
    %1695 = vmatprep.subr.bf16.mxu0 0
    %1696 = vmatpush1.bf16.msra.mxu0 0
    %1697 = vmatprep.subr.bf16.mxu0 0
    %1698 = vmatpush1.bf16.msra.mxu0 0
    %1699 = vmatprep.subr.bf16.mxu0 0
    %1700 = vmatpush1.bf16.msra.mxu0 0
    %1701 = vmatprep.subr.bf16.mxu0 0
    %1702 = vmatpush1.bf16.msra.mxu0 0
    %1703 = vmatprep.subr.bf16.mxu0 0
    %1704 = vmatpush1.bf16.msra.mxu0 0
    %1705 = vmatprep.subr.bf16.mxu0 0
    %1706 = vmatpush1.bf16.msra.mxu0 0
    %1707 = vmatprep.subr.bf16.mxu0 0
    %1708 = vmatpush1.bf16.msra.mxu0 0
    %1709 = vmatprep.subr.bf16.mxu0 0
    %1710 = vmatpush1.bf16.msra.mxu0 0
    %1711 = vmatprep.subr.bf16.mxu0 0
    %1712 = vmatpush1.bf16.msra.mxu0 0
    %1713 = vmatprep.subr.bf16.mxu0 0
    %1714 = vmatpush1.bf16.msra.mxu0 0
    %1715 = vmatprep.subr.bf16.mxu0 0
    %1716 = vmatpush1.bf16.msra.mxu0 0
    %1717 = vmatprep.subr.bf16.mxu0 0
    %1718 = vmatpush1.bf16.msra.mxu0 0
    %1719 = vmatprep.subr.bf16.mxu0 0
    %1720 = vmatpush1.bf16.msra.mxu0 0
    %1721 = vmatprep.mubr.bf16.mxu0 0
    %1722 = vmatmul.mubr.bf16.gmra.mrb[0].mxu0 %v1687
    %v1723 = vpop.f32.mrb[0].mxu0
    %v1724 = vadd.f32 %v53, %v1723
    %v1725 = vpop.f32.mrb[0].mxu0
    %v1726 = vpop.f32.mrb[0].mxu0
    %v1727 = vadd.f32 %v54, %v1726
    %v1728 = vpop.f32.mrb[0].mxu0
    %1729 = vdwg.mxu0
    %v1730 = vld [vmem:[%s6] sm:$0x1]
    %v1731 = vld [vmem:[%s7] sm:$0x1]
    %v1732 = vsel %vm82, %v1724, 0.0
    %1733 = vadd.xlane.f32.xlu0 %v1732
    %v1734 = vpop.xlane.xlu0 %1733
    %v1735 = vsel %vm82, %v1727, 0.0
    %1736 = vadd.xlane.f32.xlu0 %v1735
    %v1737 = vpop.xlane.xlu0 %1736
    %v1738 = vrcp.pop 32.0
    %v1739 = vmul.f32 %v1734, %v1738
    %v1740 = vmul.f32 %v1737, %v1738
    %v1741 = vsub.f32 %v1724, %v1739
    %v1742 = vsub.f32 %v1727, %v1740
    %v1743 = vmul.f32 %v1741, %v1741
    %v1744 = vmul.f32 %v1742, %v1742
    %v1745 = vsel %vm82, %v1743, 0.0
    %1746 = vadd.xlane.f32.xlu0 %v1745
    %v1747 = vpop.xlane.xlu0 %1746
    %v1748 = vsel %vm82, %v1744, 0.0
    %1749 = vadd.xlane.f32.xlu0 %v1748
    %v1750 = vpop.xlane.xlu0 %1749
    %v1751 = vmul.f32 %v1747, %v1738
    %v1752 = vmul.f32 %v1750, %v1738
    %v1753 = vadd.f32 %v1751, 1e-05
    %v1754 = vadd.f32 %v1752, 1e-05
    %v1755 = vrsqrt.pop %v1753
    %v1756 = vrsqrt.pop %v1754
    %v1757 = vmul.f32 %v1741, %v1755
    %v1758 = vmul.f32 %v1742, %v1756
    %v1760 = vlaneseq
    %v1761 = vshrl.u32 %v1760, 7
    %v1762 = vsub.s32 0, %v1761
    %v1763 = vrot.slane %v1730, %v1762
    %v1765 = vmul.f32 %v1757, %v1763
    %v1766 = vmul.f32 %v1758, %v1763
    %v1768 = vlaneseq
    %v1769 = vshrl.u32 %v1768, 7
    %v1770 = vsub.s32 0, %v1769
    %v1771 = vrot.slane %v1731, %v1770
    %v1773 = vadd.f32 %v1765, %v1771
    %v1774 = vadd.f32 %v1766, %v1771
    %v1775 = vpack.c.bf16 %v1774, %v1773
    %v1776 = vld [vmem:[%s8] sm:$0xf]
    %v1777 = vld [vmem:[%s8 + $0x4] sm:$0xf]
    %v1778 = vld [vmem:[%s8 + $0x8] sm:$0xf]
    %v1779 = vld [vmem:[%s8 + $0xc] sm:$0xf]
    %v1780 = vld [vmem:[%s9] sm:$0x1]
    %v1782 = vlaneseq
    %v1783 = vshrl.u32 %v1782, 7
    %v1784 = vsub.s32 0, %v1783
    %v1785 = vrot.slane %v1780, %v1784
    %v1791 = vunpack.c.l.b16 %v1776
    %v1792 = vunpack.c.l.b16 %v1777
    %v1793 = vunpack.c.l.b16 %v1778
    %v1794 = vunpack.c.l.b16 %v1779
    %v1795 = vpack.c.b16 %v1792, %v1791
    %v1796 = vpack.c.b16 %v1794, %v1793
    %v1800 = vsel %vm82, %v1775, 0
    %1802 = vmatprep.subr.bf16.mxu0 0
    %1803 = vmatpush1.bf16.msra.mxu0 %v1795
    %1804 = vmatprep.subr.bf16.mxu0 0
    %1805 = vmatpush1.bf16.msra.mxu0 %v1796
    %1806 = vmatprep.subr.bf16.mxu0 0
    %1807 = vmatpush1.bf16.msra.mxu0 0
    %1808 = vmatprep.subr.bf16.mxu0 0
    %1809 = vmatpush1.bf16.msra.mxu0 0
    %1810 = vmatprep.subr.bf16.mxu0 0
    %1811 = vmatpush1.bf16.msra.mxu0 0
    %1812 = vmatprep.subr.bf16.mxu0 0
    %1813 = vmatpush1.bf16.msra.mxu0 0
    %1814 = vmatprep.subr.bf16.mxu0 0
    %1815 = vmatpush1.bf16.msra.mxu0 0
    %1816 = vmatprep.subr.bf16.mxu0 0
    %1817 = vmatpush1.bf16.msra.mxu0 0
    %1818 = vmatprep.subr.bf16.mxu0 0
    %1819 = vmatpush1.bf16.msra.mxu0 0
    %1820 = vmatprep.subr.bf16.mxu0 0
    %1821 = vmatpush1.bf16.msra.mxu0 0
    %1822 = vmatprep.subr.bf16.mxu0 0
    %1823 = vmatpush1.bf16.msra.mxu0 0
    %1824 = vmatprep.subr.bf16.mxu0 0
    %1825 = vmatpush1.bf16.msra.mxu0 0
    %1826 = vmatprep.subr.bf16.mxu0 0
    %1827 = vmatpush1.bf16.msra.mxu0 0
    %1828 = vmatprep.subr.bf16.mxu0 0
    %1829 = vmatpush1.bf16.msra.mxu0 0
    %1830 = vmatprep.subr.bf16.mxu0 0
    %1831 = vmatpush1.bf16.msra.mxu0 0
    %1832 = vmatprep.subr.bf16.mxu0 0
    %1833 = vmatpush1.bf16.msra.mxu0 0
    %1834 = vmatprep.mubr.bf16.mxu0 0
    %1835 = vmatmul.mubr.bf16.gmra.mrb[0].mxu0 %v1800
    %v1836 = vpop.f32.mrb[0].mxu0
    %v1837 = vadd.f32 %v1785, %v1836
    %v1838 = vpop.f32.mrb[0].mxu0
    %v1839 = vpop.f32.mrb[0].mxu0
    %v1840 = vadd.f32 %v1785, %v1839
    %v1841 = vpop.f32.mrb[0].mxu0
    %1842 = vdwg.mxu0
    %v1843 = vmax.f32 %v1837, 0.0
    %v1844 = vmax.f32 %v1840, 0.0
    %v1845 = vpack.c.bf16 %v1844, %v1843
    %v1846 = vld [vmem:[%s10] sm:$0xf]
    %v1847 = vld [vmem:[%s10 + $0x4] sm:$0xf]
    %v1848 = vld [vmem:[%s10 + $0x8] sm:$0xf]
    %v1849 = vld [vmem:[%s10 + $0xc] sm:$0xf]
    %v1850 = vld [vmem:[%s10 + $0x10] sm:$0xf]
    %v1851 = vld [vmem:[%s10 + $0x14] sm:$0xf]
    %v1852 = vld [vmem:[%s10 + $0x18] sm:$0xf]
    %v1853 = vld [vmem:[%s10 + $0x1c] sm:$0xf]
    %v1854 = vld [vmem:[%s11] sm:$0x1]
    %v1856 = vlaneseq
    %v1857 = vshrl.u32 %v1856, 7
    %v1858 = vsub.s32 0, %v1857
    %v1859 = vrot.slane %v1854, %v1858
    %v1869 = vunpack.c.l.b16 %v1846
    %v1870 = vunpack.c.l.b16 %v1847
    %v1871 = vunpack.c.l.b16 %v1848
    %v1872 = vunpack.c.l.b16 %v1849
    %v1873 = vunpack.c.l.b16 %v1850
    %v1874 = vunpack.c.l.b16 %v1851
    %v1875 = vunpack.c.l.b16 %v1852
    %v1876 = vunpack.c.l.b16 %v1853
    %v1877 = vpack.c.b16 %v1870, %v1869
    %v1878 = vpack.c.b16 %v1872, %v1871
    %v1879 = vpack.c.b16 %v1874, %v1873
    %v1880 = vpack.c.b16 %v1876, %v1875
    %vm1885 = vcmask 523264
    %v1887 = vsel %vm1885, %v1845, 0
    %1889 = vmatprep.subr.bf16.mxu0 0
    %1890 = vmatpush1.bf16.msra.mxu0 %v1877
    %1891 = vmatprep.subr.bf16.mxu0 0
    %1892 = vmatpush1.bf16.msra.mxu0 %v1878
    %1893 = vmatprep.subr.bf16.mxu0 0
    %1894 = vmatpush1.bf16.msra.mxu0 %v1879
    %1895 = vmatprep.subr.bf16.mxu0 0
    %1896 = vmatpush1.bf16.msra.mxu0 %v1880
    %1897 = vmatprep.subr.bf16.mxu0 0
    %1898 = vmatpush1.bf16.msra.mxu0 0
    %1899 = vmatprep.subr.bf16.mxu0 0
    %1900 = vmatpush1.bf16.msra.mxu0 0
    %1901 = vmatprep.subr.bf16.mxu0 0
    %1902 = vmatpush1.bf16.msra.mxu0 0
    %1903 = vmatprep.subr.bf16.mxu0 0
    %1904 = vmatpush1.bf16.msra.mxu0 0
    %1905 = vmatprep.subr.bf16.mxu0 0
    %1906 = vmatpush1.bf16.msra.mxu0 0
    %1907 = vmatprep.subr.bf16.mxu0 0
    %1908 = vmatpush1.bf16.msra.mxu0 0
    %1909 = vmatprep.subr.bf16.mxu0 0
    %1910 = vmatpush1.bf16.msra.mxu0 0
    %1911 = vmatprep.subr.bf16.mxu0 0
    %1912 = vmatpush1.bf16.msra.mxu0 0
    %1913 = vmatprep.subr.bf16.mxu0 0
    %1914 = vmatpush1.bf16.msra.mxu0 0
    %1915 = vmatprep.subr.bf16.mxu0 0
    %1916 = vmatpush1.bf16.msra.mxu0 0
    %1917 = vmatprep.subr.bf16.mxu0 0
    %1918 = vmatpush1.bf16.msra.mxu0 0
    %1919 = vmatprep.subr.bf16.mxu0 0
    %1920 = vmatpush1.bf16.msra.mxu0 0
    %1921 = vmatprep.mubr.bf16.mxu0 0
    %1922 = vmatmul.mubr.bf16.gmra.mrb[0].mxu0 %v1887
    %v1923 = vpop.f32.mrb[0].mxu0
    %v1924 = vadd.f32 %v1859, %v1923
    %v1925 = vpop.f32.mrb[0].mxu0
    %v1926 = vpop.f32.mrb[0].mxu0
    %v1927 = vadd.f32 %v1859, %v1926
    %v1928 = vpop.f32.mrb[0].mxu0
    %1929 = vdwg.mxu0
    %v1930 = vadd.f32 %v1924, %v1773
    %v1931 = vadd.f32 %v1927, %v1774
    %v1932 = vld [vmem:[%s12] sm:$0x1]
    %v1933 = vld [vmem:[%s13] sm:$0x1]
    %v1934 = vsel %vm82, %v1930, 0.0
    %1935 = vadd.xlane.f32.xlu0 %v1934
    %v1936 = vpop.xlane.xlu0 %1935
    %v1937 = vsel %vm82, %v1931, 0.0
    %1938 = vadd.xlane.f32.xlu0 %v1937
    %v1939 = vpop.xlane.xlu0 %1938
    %v1940 = vmul.f32 %v1936, %v1738
    %v1941 = vmul.f32 %v1939, %v1738
    %v1942 = vsub.f32 %v1930, %v1940
    %v1943 = vsub.f32 %v1931, %v1941
    %v1944 = vmul.f32 %v1942, %v1942
    %v1945 = vmul.f32 %v1943, %v1943
    %v1946 = vsel %vm82, %v1944, 0.0
    %1947 = vadd.xlane.f32.xlu0 %v1946
    %v1948 = vpop.xlane.xlu0 %1947
    %v1949 = vsel %vm82, %v1945, 0.0
    %1950 = vadd.xlane.f32.xlu0 %v1949
    %v1951 = vpop.xlane.xlu0 %1950
    %v1952 = vmul.f32 %v1948, %v1738
    %v1953 = vmul.f32 %v1951, %v1738
    %v1954 = vadd.f32 %v1952, 1e-05
    %v1955 = vadd.f32 %v1953, 1e-05
    %v1956 = vrsqrt.pop %v1954
    %v1957 = vrsqrt.pop %v1955
    %v1958 = vmul.f32 %v1942, %v1956
    %v1959 = vmul.f32 %v1943, %v1957
    %v1961 = vlaneseq
    %v1962 = vshrl.u32 %v1961, 7
    %v1963 = vsub.s32 0, %v1962
    %v1964 = vrot.slane %v1932, %v1963
    %v1966 = vmul.f32 %v1958, %v1964
    %v1967 = vmul.f32 %v1959, %v1964
    %v1969 = vlaneseq
    %v1970 = vshrl.u32 %v1969, 7
    %v1971 = vsub.s32 0, %v1970
    %v1972 = vrot.slane %v1933, %v1971
    %v1974 = vadd.f32 %v1966, %v1972
    %v1975 = vadd.f32 %v1967, %v1972
    %1976 = vst.msk [vmem:[#allocation4] sm:$0xff] %vm82, %v1974
    %1977 = vst.msk [vmem:[#allocation4 + $0x8] sm:$0xff] %vm82, %v1975
    // Predicated region
    $region54: #{tpu_custom_call.1} parent=1 // pred_check
      _
    $region55: #{tpu_custom_call.1} parent=1 // pred_check_branch
      %1979 = sbr.rel (0) target = $region57
    $region56: #{tpu_custom_call.1} parent=1 // pred_region
      %s1981 = ssub.s32 256, 256
      %1982 = vsyncadd [#allocation5], %s1981
      %s1983 = sshll.u32 [#allocation4], 4
      %s1984 = int_to_ptr.vmem [resolvable:$true] %s1983
      %1989 = dma.vmem_to_hbm [thread:$0]  %s1984, 256, %s14, [#allocation5], 128, 128, 8
    $region57: #{tpu_custom_call.1} parent=1 // pred_fallthru
      _
    // Predicated region
    $region58: #{tpu_custom_call.1} parent=1 // pred_check
      _
    $region59: #{tpu_custom_call.1} parent=1 // pred_check_branch
      %1991 = sbr.rel (0) target = $region61
    $region60: #{tpu_custom_call.1} parent=1 // pred_region
      %1992 = dma.done [#allocation5], 256
    $region61: #{tpu_custom_call.1} parent=1 // pred_fallthru
      _
    %1993 = vsyncpa [#allocation5], 1

</llo_original>
